<compile_context>
chip_gen: v7x
topology: tpu7x:2x2x1
jax: 0.10.0
libtpu: 0.0.40
codegen_flags: <defaults>
</compile_context>

<pallas_src>
import functools

import jax
import jax.numpy as jnp
import numpy as np
from jax.experimental import pallas as pl
from jax.experimental.pallas import tpu as pltpu


def _attention_kernel(x_ref, y_ref, wq_ref, wk_ref, wv_ref, wp_ref, bp_ref,
                      out_ref, attn_ref, *, num_heads, head_dim, mxu_dtype):
    """Grid = (batch,). One step handles one batch element, all heads."""

    def mm(a):
        # Cast MXU operands only; accumulation and softmax stay f32.
        return a if mxu_dtype is None else a.astype(mxu_dtype)

    x = x_ref[0]            # (N, C)  (already mxu_dtype if the bf16 path is on)
    y = y_ref[0]            # (N, C)

    # Full-width projections (scale pre-folded into Wq). Lane-dense MXU work.
    q_full = jnp.dot(x, wq_ref[...], preferred_element_type=jnp.float32)   # (N, C)
    k_full = jnp.dot(y, wk_ref[...], preferred_element_type=jnp.float32)   # (N, C)
    v_full = jnp.dot(y, wv_ref[...], preferred_element_type=jnp.float32)   # (N, C)

    ctx_parts = []
    for h in range(num_heads):               # static unroll: static lane slices
        lo = h * head_dim
        hi = lo + head_dim
        q_h = q_full[:, lo:hi]               # (N, hd)
        k_h = k_full[:, lo:hi]               # (N, hd)
        v_h = v_full[:, lo:hi]               # (N, hd)

        # q @ k^T without materializing a transpose (contract last dims).
        s = jax.lax.dot_general(
            mm(q_h), mm(k_h),
            dimension_numbers=(((1,), (1,)), ((), ())),
            preferred_element_type=jnp.float32)                            # (N, N)

        # Exact softmax in f32 (attn is an output consumed downstream).
        s = s - jnp.max(s, axis=-1, keepdims=True)
        p = jnp.exp(s)
        p = p / jnp.sum(p, axis=-1, keepdims=True)

        attn_ref[0, h] = p.astype(attn_ref.dtype)

        ctx_parts.append(
            jnp.dot(mm(p), mm(v_h), preferred_element_type=jnp.float32))   # (N, hd)

    # Lane-concatenated context -> single full-depth output projection + bias.
    ctx = jnp.concatenate(ctx_parts, axis=-1)                              # (N, C)
    out = jnp.dot(mm(ctx), wp_ref[...], preferred_element_type=jnp.float32)
    out = out + bp_ref[...]                                                # (1,C) bcast
    out_ref[0] = out.astype(out_ref.dtype)


def attention_pallas(x, y, wq, wkv, wp, bp, *, num_heads, mxu_dtype=None,
                     attn_dtype=jnp.float32):
    """x, y: (B, N, C). Weights in PyTorch layout: wq (C,C), wkv (2C,C), wp (C,C), bp (C,)."""
    B, N, C = x.shape
    H = num_heads
    hd = C // H
    scale = hd ** (-0.5)
    out_dtype = x.dtype

    # Host-side weight prep: (out,in) -> (in,out), fold softmax scale into Wq.
    wq_t = wq.T * scale                                   # (C, C)
    wkv_t = wkv.T                                         # (C, 2C)
    wk_t, wv_t = wkv_t[:, :C], wkv_t[:, C:]               # (C, C) each
    wp_t = wp.T                                           # (C, C)
    bp_2d = bp.reshape(1, C)                              # kept f32 (added post-acc)

    if mxu_dtype is not None:
        # Cast MXU operands at the boundary: halves x/y DMA, no in-kernel casts.
        x = x.astype(mxu_dtype)
        y = y.astype(mxu_dtype)
        wq_t = wq_t.astype(mxu_dtype)
        wk_t = wk_t.astype(mxu_dtype)
        wv_t = wv_t.astype(mxu_dtype)
        wp_t = wp_t.astype(mxu_dtype)

    kernel = functools.partial(_attention_kernel, num_heads=H, head_dim=hd,
                               mxu_dtype=mxu_dtype)

    out, attn = pl.pallas_call(
        kernel,
        out_shape=(
            jax.ShapeDtypeStruct((B, N, C), out_dtype),
            jax.ShapeDtypeStruct((B, H, N, N), attn_dtype),
        ),
        grid_spec=pltpu.PrefetchScalarGridSpec(
            num_scalar_prefetch=0,
            grid=(B,),
            in_specs=[
                pl.BlockSpec((1, N, C), lambda b: (b, 0, 0)),   # x
                pl.BlockSpec((1, N, C), lambda b: (b, 0, 0)),   # y
                pl.BlockSpec((C, C), lambda b: (0, 0)),         # Wq (scale folded)
                pl.BlockSpec((C, C), lambda b: (0, 0)),         # Wk
                pl.BlockSpec((C, C), lambda b: (0, 0)),         # Wv
                pl.BlockSpec((C, C), lambda b: (0, 0)),         # Wp
                pl.BlockSpec((1, C), lambda b: (0, 0)),         # proj bias
            ],
            out_specs=[
                pl.BlockSpec((1, N, C), lambda b: (b, 0, 0)),        # out
                pl.BlockSpec((1, H, N, N), lambda b: (b, 0, 0, 0)),  # attn
            ],
        ),
        compiler_params=pltpu.CompilerParams(
            dimension_semantics=("parallel",)),
    )(x, y, wq_t, wk_t, wv_t, wp_t, bp_2d)
    return out, attn


def attention_reference(x, y, wq, wkv, wp, bp, *, num_heads):
    """Pure-JAX mirror of the PyTorch forward (dropout p=0)."""
    B, N, C = x.shape
    hd = C // num_heads
    scale = hd ** (-0.5)
    q = x @ wq.T
    kv = y @ wkv.T
    k, v = kv[..., :C], kv[..., C:]
    qh = q.reshape(B, N, num_heads, hd).transpose(0, 2, 1, 3)
    kh = k.reshape(B, N, num_heads, hd).transpose(0, 2, 1, 3)
    vh = v.reshape(B, N, num_heads, hd).transpose(0, 2, 1, 3)
    attn = jnp.einsum("bhqd,bhkd->bhqk", qh, kh) * scale
    attn = jax.nn.softmax(attn, axis=-1)
    ctx = jnp.einsum("bhqk,bhkd->bhqd", attn, vh)
    ctx = ctx.transpose(0, 2, 1, 3).reshape(B, N, C)
    out = ctx @ wp.T + bp
    return out, attn


if __name__ == "__main__":
    B, N, C = 2, 8, 32
    num_heads = 4

    key = jax.random.PRNGKey(0)
    kx, ky, kq, kkv, kp, kb = jax.random.split(key, 6)

    x = jax.random.normal(kx, (B, N, C), dtype=jnp.float32)
    y = jax.random.normal(ky, (B, N, C), dtype=jnp.float32)

    # Deterministic synthetic parameters (PyTorch weight layout: (out, in)).
    wq = 0.05 * jax.random.normal(kq, (C, C), dtype=jnp.float32)
    wkv = 0.05 * jax.random.normal(kkv, (2 * C, C), dtype=jnp.float32)
    wp = 0.05 * jax.random.normal(kp, (C, C), dtype=jnp.float32)
    bp = 0.05 * jax.random.normal(kb, (C,), dtype=jnp.float32)

    out_ref, attn_ref = attention_reference(x, y, wq, wkv, wp, bp, num_heads=num_heads)

    # f32 path (exact softmax; matmul rounding only).
    out, attn = attention_pallas(x, y, wq, wkv, wp, bp, num_heads=num_heads)
    out = jax.block_until_ready(out)
    attn = jax.block_until_ready(attn)
    np.testing.assert_allclose(np.asarray(out), np.asarray(out_ref), rtol=5e-3, atol=5e-4)
    np.testing.assert_allclose(np.asarray(attn), np.asarray(attn_ref), rtol=5e-3, atol=5e-4)

    # bf16 MXU-operand path (f32 accumulation, f32 softmax).
    out_bf, attn_bf = attention_pallas(x, y, wq, wkv, wp, bp, num_heads=num_heads,
                                       mxu_dtype=jnp.bfloat16)
    out_bf = jax.block_until_ready(out_bf)
    attn_bf = jax.block_until_ready(attn_bf)
    np.testing.assert_allclose(np.asarray(out_bf), np.asarray(out_ref), rtol=5e-2, atol=5e-2)
    np.testing.assert_allclose(np.asarray(attn_bf), np.asarray(attn_ref), rtol=5e-2, atol=5e-2)

    print("KERNEL_OK")
</pallas_src>

<mosaic_0001>
module attributes {stable_mosaic.version = 11 : i64} {
  func.func @_attention_kernel(%arg0: i32, %arg1: memref<1x8x32xf32, #tpu.memory_space<vmem>>, %arg2: memref<1x8x32xf32, #tpu.memory_space<vmem>>, %arg3: memref<32x32xf32, #tpu.memory_space<vmem>>, %arg4: memref<32x32xf32, #tpu.memory_space<vmem>>, %arg5: memref<32x32xf32, #tpu.memory_space<vmem>>, %arg6: memref<32x32xf32, #tpu.memory_space<vmem>>, %arg7: memref<1x32xf32, #tpu.memory_space<vmem>>, %arg8: memref<1x8x32xf32, #tpu.memory_space<vmem>>, %arg9: memref<1x4x8x8xf32, #tpu.memory_space<vmem>>) attributes {dimension_semantics = [#tpu.dimension_semantics<parallel>], iteration_bounds = array<i64: 2>, scalar_prefetch = 0 : i64, scratch_operands = 0 : i64, tpu.core_type = #tpu.core_type<tc>, window_params = [{transform_indices = @transform_0, window_bounds = array<i64: 1, 8, 32>}, {transform_indices = @transform_1, window_bounds = array<i64: 1, 8, 32>}, {pipeline_mode = #tpu.pipeline_mode<synchronous>, transform_indices = @transform_2, window_bounds = array<i64: 32, 32>}, {pipeline_mode = #tpu.pipeline_mode<synchronous>, transform_indices = @transform_3, window_bounds = array<i64: 32, 32>}, {pipeline_mode = #tpu.pipeline_mode<synchronous>, transform_indices = @transform_4, window_bounds = array<i64: 32, 32>}, {pipeline_mode = #tpu.pipeline_mode<synchronous>, transform_indices = @transform_5, window_bounds = array<i64: 32, 32>}, {pipeline_mode = #tpu.pipeline_mode<synchronous>, transform_indices = @transform_6, window_bounds = array<i64: 1, 32>}, {transform_indices = @transform_7, window_bounds = array<i64: 1, 8, 32>}, {transform_indices = @transform_8, window_bounds = array<i64: 1, 4, 8, 8>}]} {
    %c0 = arith.constant 0 : index
    %c0_0 = arith.constant 0 : index
    %c0_1 = arith.constant 0 : index
    %0 = vector.load %arg1[%c0, %c0_0, %c0_1] : memref<1x8x32xf32, #tpu.memory_space<vmem>>, vector<1x8x32xf32>
    %1 = vector.shape_cast %0 : vector<1x8x32xf32> to vector<8x32xf32>
    %c0_2 = arith.constant 0 : index
    %c0_3 = arith.constant 0 : index
    %c0_4 = arith.constant 0 : index
    %2 = vector.load %arg2[%c0_2, %c0_3, %c0_4] : memref<1x8x32xf32, #tpu.memory_space<vmem>>, vector<1x8x32xf32>
    %3 = vector.shape_cast %2 : vector<1x8x32xf32> to vector<8x32xf32>
    %c0_5 = arith.constant 0 : index
    %c0_6 = arith.constant 0 : index
    %4 = vector.load %arg3[%c0_5, %c0_6] : memref<32x32xf32, #tpu.memory_space<vmem>>, vector<32x32xf32>
    %cst = arith.constant dense<0.000000e+00> : vector<8x32xf32>
    %5 = tpu.matmul %1, %4, %cst {dimension_numbers = #tpu.dot_dimension_numbers<[1], [0], [0], [1], [0, 0, 1, 1], [], []>} : vector<8x32xf32>, vector<32x32xf32>, vector<8x32xf32> -> vector<8x32xf32>
    %c0_7 = arith.constant 0 : index
    %c0_8 = arith.constant 0 : index
    %6 = vector.load %arg4[%c0_7, %c0_8] : memref<32x32xf32, #tpu.memory_space<vmem>>, vector<32x32xf32>
    %cst_9 = arith.constant dense<0.000000e+00> : vector<8x32xf32>
    %7 = tpu.matmul %3, %6, %cst_9 {dimension_numbers = #tpu.dot_dimension_numbers<[1], [0], [0], [1], [0, 0, 1, 1], [], []>} : vector<8x32xf32>, vector<32x32xf32>, vector<8x32xf32> -> vector<8x32xf32>
    %c0_10 = arith.constant 0 : index
    %c0_11 = arith.constant 0 : index
    %8 = vector.load %arg5[%c0_10, %c0_11] : memref<32x32xf32, #tpu.memory_space<vmem>>, vector<32x32xf32>
    %cst_12 = arith.constant dense<0.000000e+00> : vector<8x32xf32>
    %9 = tpu.matmul %3, %8, %cst_12 {dimension_numbers = #tpu.dot_dimension_numbers<[1], [0], [0], [1], [0, 0, 1, 1], [], []>} : vector<8x32xf32>, vector<32x32xf32>, vector<8x32xf32> -> vector<8x32xf32>
    %10 = vector.extract_strided_slice %5 {offsets = [0, 0], sizes = [8, 8], strides = [1, 1]} : vector<8x32xf32> to vector<8x8xf32>
    %11 = vector.extract_strided_slice %7 {offsets = [0, 0], sizes = [8, 8], strides = [1, 1]} : vector<8x32xf32> to vector<8x8xf32>
    %12 = vector.extract_strided_slice %9 {offsets = [0, 0], sizes = [8, 8], strides = [1, 1]} : vector<8x32xf32> to vector<8x8xf32>
    %cst_13 = arith.constant dense<0.000000e+00> : vector<8x8xf32>
    %13 = tpu.matmul %10, %11, %cst_13 {dimension_numbers = #tpu.dot_dimension_numbers<[1], [1], [0], [0], [0, 0, 1, 0], [], []>} : vector<8x8xf32>, vector<8x8xf32>, vector<8x8xf32> -> vector<8x8xf32>
    %cst_14 = arith.constant dense<0xFF800000> : vector<8xf32>
    %14 = vector.multi_reduction <maximumf>, %13, %cst_14 [1] : vector<8x8xf32> to vector<8xf32>
    %15 = vector.shape_cast %14 : vector<8xf32> to vector<8x1xf32>
    %16 = vector.broadcast %15 : vector<8x1xf32> to vector<8x8xf32>
    %17 = arith.subf %13, %16 : vector<8x8xf32>
    %18 = math.exp %17 : vector<8x8xf32>
    %cst_15 = arith.constant dense<0.000000e+00> : vector<8xf32>
    %19 = vector.multi_reduction <add>, %18, %cst_15 [1] : vector<8x8xf32> to vector<8xf32>
    %20 = vector.shape_cast %19 : vector<8xf32> to vector<8x1xf32>
    %21 = vector.broadcast %20 : vector<8x1xf32> to vector<8x8xf32>
    %22 = arith.divf %18, %21 : vector<8x8xf32>
    %c0_16 = arith.constant 0 : index
    %c0_17 = arith.constant 0 : index
    %c0_18 = arith.constant 0 : index
    %c0_19 = arith.constant 0 : index
    %23 = vector.load %arg9[%c0_16, %c0_17, %c0_18, %c0_19] : memref<1x4x8x8xf32, #tpu.memory_space<vmem>>, vector<1x1x8x8xf32>
    %24 = vector.shape_cast %23 : vector<1x1x8x8xf32> to vector<8x8xf32>
    %25 = vector.shape_cast %22 : vector<8x8xf32> to vector<1x1x8x8xf32>
    tpu.vector_store %arg9[%c0_16, %c0_17, %c0_18, %c0_19], %25 {strides = array<i32>} : memref<1x4x8x8xf32, #tpu.memory_space<vmem>>, vector<1x1x8x8xf32>,
    %cst_20 = arith.constant dense<0.000000e+00> : vector<8x8xf32>
    %26 = tpu.matmul %22, %12, %cst_20 {dimension_numbers = #tpu.dot_dimension_numbers<[1], [0], [0], [1], [0, 0, 1, 1], [], []>} : vector<8x8xf32>, vector<8x8xf32>, vector<8x8xf32> -> vector<8x8xf32>
    %27 = vector.extract_strided_slice %5 {offsets = [0, 8], sizes = [8, 8], strides = [1, 1]} : vector<8x32xf32> to vector<8x8xf32>
    %28 = vector.extract_strided_slice %7 {offsets = [0, 8], sizes = [8, 8], strides = [1, 1]} : vector<8x32xf32> to vector<8x8xf32>
    %29 = vector.extract_strided_slice %9 {offsets = [0, 8], sizes = [8, 8], strides = [1, 1]} : vector<8x32xf32> to vector<8x8xf32>
    %cst_21 = arith.constant dense<0.000000e+00> : vector<8x8xf32>
    %30 = tpu.matmul %27, %28, %cst_21 {dimension_numbers = #tpu.dot_dimension_numbers<[1], [1], [0], [0], [0, 0, 1, 0], [], []>} : vector<8x8xf32>, vector<8x8xf32>, vector<8x8xf32> -> vector<8x8xf32>
    %cst_22 = arith.constant dense<0xFF800000> : vector<8xf32>
    %31 = vector.multi_reduction <maximumf>, %30, %cst_22 [1] : vector<8x8xf32> to vector<8xf32>
    %32 = vector.shape_cast %31 : vector<8xf32> to vector<8x1xf32>
    %33 = vector.broadcast %32 : vector<8x1xf32> to vector<8x8xf32>
    %34 = arith.subf %30, %33 : vector<8x8xf32>
    %35 = math.exp %34 : vector<8x8xf32>
    %cst_23 = arith.constant dense<0.000000e+00> : vector<8xf32>
    %36 = vector.multi_reduction <add>, %35, %cst_23 [1] : vector<8x8xf32> to vector<8xf32>
    %37 = vector.shape_cast %36 : vector<8xf32> to vector<8x1xf32>
    %38 = vector.broadcast %37 : vector<8x1xf32> to vector<8x8xf32>
    %39 = arith.divf %35, %38 : vector<8x8xf32>
    %c0_24 = arith.constant 0 : index
    %c1 = arith.constant 1 : index
    %c0_25 = arith.constant 0 : index
    %c0_26 = arith.constant 0 : index
    %40 = vector.load %arg9[%c0_24, %c1, %c0_25, %c0_26] : memref<1x4x8x8xf32, #tpu.memory_space<vmem>>, vector<1x1x8x8xf32>
    %41 = vector.shape_cast %40 : vector<1x1x8x8xf32> to vector<8x8xf32>
    %42 = vector.shape_cast %39 : vector<8x8xf32> to vector<1x1x8x8xf32>
    tpu.vector_store %arg9[%c0_24, %c1, %c0_25, %c0_26], %42 {strides = array<i32>} : memref<1x4x8x8xf32, #tpu.memory_space<vmem>>, vector<1x1x8x8xf32>,
    %cst_27 = arith.constant dense<0.000000e+00> : vector<8x8xf32>
    %43 = tpu.matmul %39, %29, %cst_27 {dimension_numbers = #tpu.dot_dimension_numbers<[1], [0], [0], [1], [0, 0, 1, 1], [], []>} : vector<8x8xf32>, vector<8x8xf32>, vector<8x8xf32> -> vector<8x8xf32>
    %44 = vector.extract_strided_slice %5 {offsets = [0, 16], sizes = [8, 8], strides = [1, 1]} : vector<8x32xf32> to vector<8x8xf32>
    %45 = vector.extract_strided_slice %7 {offsets = [0, 16], sizes = [8, 8], strides = [1, 1]} : vector<8x32xf32> to vector<8x8xf32>
    %46 = vector.extract_strided_slice %9 {offsets = [0, 16], sizes = [8, 8], strides = [1, 1]} : vector<8x32xf32> to vector<8x8xf32>
    %cst_28 = arith.constant dense<0.000000e+00> : vector<8x8xf32>
    %47 = tpu.matmul %44, %45, %cst_28 {dimension_numbers = #tpu.dot_dimension_numbers<[1], [1], [0], [0], [0, 0, 1, 0], [], []>} : vector<8x8xf32>, vector<8x8xf32>, vector<8x8xf32> -> vector<8x8xf32>
    %cst_29 = arith.constant dense<0xFF800000> : vector<8xf32>
    %48 = vector.multi_reduction <maximumf>, %47, %cst_29 [1] : vector<8x8xf32> to vector<8xf32>
    %49 = vector.shape_cast %48 : vector<8xf32> to vector<8x1xf32>
    %50 = vector.broadcast %49 : vector<8x1xf32> to vector<8x8xf32>
    %51 = arith.subf %47, %50 : vector<8x8xf32>
    %52 = math.exp %51 : vector<8x8xf32>
    %cst_30 = arith.constant dense<0.000000e+00> : vector<8xf32>
    %53 = vector.multi_reduction <add>, %52, %cst_30 [1] : vector<8x8xf32> to vector<8xf32>
    %54 = vector.shape_cast %53 : vector<8xf32> to vector<8x1xf32>
    %55 = vector.broadcast %54 : vector<8x1xf32> to vector<8x8xf32>
    %56 = arith.divf %52, %55 : vector<8x8xf32>
    %c0_31 = arith.constant 0 : index
    %c2 = arith.constant 2 : index
    %c0_32 = arith.constant 0 : index
    %c0_33 = arith.constant 0 : index
    %57 = vector.load %arg9[%c0_31, %c2, %c0_32, %c0_33] : memref<1x4x8x8xf32, #tpu.memory_space<vmem>>, vector<1x1x8x8xf32>
    %58 = vector.shape_cast %57 : vector<1x1x8x8xf32> to vector<8x8xf32>
    %59 = vector.shape_cast %56 : vector<8x8xf32> to vector<1x1x8x8xf32>
    tpu.vector_store %arg9[%c0_31, %c2, %c0_32, %c0_33], %59 {strides = array<i32>} : memref<1x4x8x8xf32, #tpu.memory_space<vmem>>, vector<1x1x8x8xf32>,
    %cst_34 = arith.constant dense<0.000000e+00> : vector<8x8xf32>
    %60 = tpu.matmul %56, %46, %cst_34 {dimension_numbers = #tpu.dot_dimension_numbers<[1], [0], [0], [1], [0, 0, 1, 1], [], []>} : vector<8x8xf32>, vector<8x8xf32>, vector<8x8xf32> -> vector<8x8xf32>
    %61 = vector.extract_strided_slice %5 {offsets = [0, 24], sizes = [8, 8], strides = [1, 1]} : vector<8x32xf32> to vector<8x8xf32>
    %62 = vector.extract_strided_slice %7 {offsets = [0, 24], sizes = [8, 8], strides = [1, 1]} : vector<8x32xf32> to vector<8x8xf32>
    %63 = vector.extract_strided_slice %9 {offsets = [0, 24], sizes = [8, 8], strides = [1, 1]} : vector<8x32xf32> to vector<8x8xf32>
    %cst_35 = arith.constant dense<0.000000e+00> : vector<8x8xf32>
    %64 = tpu.matmul %61, %62, %cst_35 {dimension_numbers = #tpu.dot_dimension_numbers<[1], [1], [0], [0], [0, 0, 1, 0], [], []>} : vector<8x8xf32>, vector<8x8xf32>, vector<8x8xf32> -> vector<8x8xf32>
    %cst_36 = arith.constant dense<0xFF800000> : vector<8xf32>
    %65 = vector.multi_reduction <maximumf>, %64, %cst_36 [1] : vector<8x8xf32> to vector<8xf32>
    %66 = vector.shape_cast %65 : vector<8xf32> to vector<8x1xf32>
    %67 = vector.broadcast %66 : vector<8x1xf32> to vector<8x8xf32>
    %68 = arith.subf %64, %67 : vector<8x8xf32>
    %69 = math.exp %68 : vector<8x8xf32>
    %cst_37 = arith.constant dense<0.000000e+00> : vector<8xf32>
    %70 = vector.multi_reduction <add>, %69, %cst_37 [1] : vector<8x8xf32> to vector<8xf32>
    %71 = vector.shape_cast %70 : vector<8xf32> to vector<8x1xf32>
    %72 = vector.broadcast %71 : vector<8x1xf32> to vector<8x8xf32>
    %73 = arith.divf %69, %72 : vector<8x8xf32>
    %c0_38 = arith.constant 0 : index
    %c3 = arith.constant 3 : index
    %c0_39 = arith.constant 0 : index
    %c0_40 = arith.constant 0 : index
    %74 = vector.load %arg9[%c0_38, %c3, %c0_39, %c0_40] : memref<1x4x8x8xf32, #tpu.memory_space<vmem>>, vector<1x1x8x8xf32>
    %75 = vector.shape_cast %74 : vector<1x1x8x8xf32> to vector<8x8xf32>
    %76 = vector.shape_cast %73 : vector<8x8xf32> to vector<1x1x8x8xf32>
    tpu.vector_store %arg9[%c0_38, %c3, %c0_39, %c0_40], %76 {strides = array<i32>} : memref<1x4x8x8xf32, #tpu.memory_space<vmem>>, vector<1x1x8x8xf32>,
    %cst_41 = arith.constant dense<0.000000e+00> : vector<8x8xf32>
    %77 = tpu.matmul %73, %63, %cst_41 {dimension_numbers = #tpu.dot_dimension_numbers<[1], [0], [0], [1], [0, 0, 1, 1], [], []>} : vector<8x8xf32>, vector<8x8xf32>, vector<8x8xf32> -> vector<8x8xf32>
    %78 = tpu.concatenate %26, %43, %60, %77 in 1 : vector<8x8xf32>, vector<8x8xf32>, vector<8x8xf32>, vector<8x8xf32> -> vector<8x32xf32>
    %c0_42 = arith.constant 0 : index
    %c0_43 = arith.constant 0 : index
    %79 = vector.load %arg6[%c0_42, %c0_43] : memref<32x32xf32, #tpu.memory_space<vmem>>, vector<32x32xf32>
    %cst_44 = arith.constant dense<0.000000e+00> : vector<8x32xf32>
    %80 = tpu.matmul %78, %79, %cst_44 {dimension_numbers = #tpu.dot_dimension_numbers<[1], [0], [0], [1], [0, 0, 1, 1], [], []>} : vector<8x32xf32>, vector<32x32xf32>, vector<8x32xf32> -> vector<8x32xf32>
    %c0_45 = arith.constant 0 : index
    %c0_46 = arith.constant 0 : index
    %81 = vector.load %arg7[%c0_45, %c0_46] : memref<1x32xf32, #tpu.memory_space<vmem>>, vector<1x32xf32>
    %82 = vector.broadcast %81 : vector<1x32xf32> to vector<8x32xf32>
    %83 = arith.addf %80, %82 : vector<8x32xf32>
    %c0_47 = arith.constant 0 : index
    %c0_48 = arith.constant 0 : index
    %c0_49 = arith.constant 0 : index
    %84 = vector.load %arg8[%c0_47, %c0_48, %c0_49] : memref<1x8x32xf32, #tpu.memory_space<vmem>>, vector<1x8x32xf32>
    %85 = vector.shape_cast %84 : vector<1x8x32xf32> to vector<8x32xf32>
    %86 = vector.shape_cast %83 : vector<8x32xf32> to vector<1x8x32xf32>
    tpu.vector_store %arg8[%c0_47, %c0_48, %c0_49], %86 {strides = array<i32>} : memref<1x8x32xf32, #tpu.memory_space<vmem>>, vector<1x8x32xf32>,
    return
  }
  func.func @transform_0(%arg0: i32) -> (i32, i32, i32) {
    %c0_i32 = arith.constant 0 : i32
    %c0_i32_0 = arith.constant 0 : i32
    %c0_i32_1 = arith.constant 0 : i32
    return %arg0, %c0_i32, %c0_i32_0 : i32, i32, i32
  }
  func.func @transform_1(%arg0: i32) -> (i32, i32, i32) {
    %c0_i32 = arith.constant 0 : i32
    %c0_i32_0 = arith.constant 0 : i32
    %c0_i32_1 = arith.constant 0 : i32
    return %arg0, %c0_i32, %c0_i32_0 : i32, i32, i32
  }
  func.func @transform_2(%arg0: i32) -> (i32, i32) {
    %c0_i32 = arith.constant 0 : i32
    %c0_i32_0 = arith.constant 0 : i32
    %c0_i32_1 = arith.constant 0 : i32
    return %c0_i32, %c0_i32_0 : i32, i32
  }
  func.func @transform_3(%arg0: i32) -> (i32, i32) {
    %c0_i32 = arith.constant 0 : i32
    %c0_i32_0 = arith.constant 0 : i32
    %c0_i32_1 = arith.constant 0 : i32
    return %c0_i32, %c0_i32_0 : i32, i32
  }
  func.func @transform_4(%arg0: i32) -> (i32, i32) {
    %c0_i32 = arith.constant 0 : i32
    %c0_i32_0 = arith.constant 0 : i32
    %c0_i32_1 = arith.constant 0 : i32
    return %c0_i32, %c0_i32_0 : i32, i32
  }
  func.func @transform_5(%arg0: i32) -> (i32, i32) {
    %c0_i32 = arith.constant 0 : i32
    %c0_i32_0 = arith.constant 0 : i32
    %c0_i32_1 = arith.constant 0 : i32
    return %c0_i32, %c0_i32_0 : i32, i32
  }
  func.func @transform_6(%arg0: i32) -> (i32, i32) {
    %c0_i32 = arith.constant 0 : i32
    %c0_i32_0 = arith.constant 0 : i32
    %c0_i32_1 = arith.constant 0 : i32
    return %c0_i32, %c0_i32_0 : i32, i32
  }
  func.func @transform_7(%arg0: i32) -> (i32, i32, i32) {
    %c0_i32 = arith.constant 0 : i32
    %c0_i32_0 = arith.constant 0 : i32
    %c0_i32_1 = arith.constant 0 : i32
    return %arg0, %c0_i32, %c0_i32_0 : i32, i32, i32
  }
  func.func @transform_8(%arg0: i32) -> (i32, i32, i32, i32) {
    %c0_i32 = arith.constant 0 : i32
    %c0_i32_0 = arith.constant 0 : i32
    %c0_i32_1 = arith.constant 0 : i32
    %c0_i32_2 = arith.constant 0 : i32
    return %arg0, %c0_i32, %c0_i32_0, %c0_i32_1 : i32, i32, i32, i32
  }
}

</mosaic_0001>

<llo_original>
// kernel: tpu_custom_call.1
$region0: #{tpu_custom_call.1}
  #allocation0 [shape = 'u32[]', space=smem, size = 0x4, offset = 0x4, fixed_abs, tag = 'smem constant byte address 0x4 - core index']
  #allocation1 [shape = 'u32[144,128]{1,0:T(1,128)}', space=vmem, size = 0x12000, scoped, tag = 'internal scratch']
  %s0 = inlined_call_operand.hbm [shape: f32[2,8,32], index: 0, kind: input, shape index: {}]
  %s1 = inlined_call_operand.hbm [shape: f32[2,8,32], index: 1, kind: input, shape index: {}]
  %s2 = inlined_call_operand.hbm [shape: f32[32,32], index: 2, kind: input, shape index: {}]
  %s3 = inlined_call_operand.hbm [shape: f32[32,32], index: 3, kind: input, shape index: {}]
  %s4 = inlined_call_operand.hbm [shape: f32[32,32], index: 4, kind: input, shape index: {}]
  %s5 = inlined_call_operand.hbm [shape: f32[32,32], index: 5, kind: input, shape index: {}]
  %s6 = inlined_call_operand.vmem [shape: f32[1,32], index: 6, kind: input, shape index: {}]
  %s7 = inlined_call_operand.hbm [shape: f32[2,8,32], index: 7, kind: output, shape index: {0}]
  %s8 = inlined_call_operand.hbm [shape: f32[2,4,8,8], index: 8, kind: output, shape index: {1}]
  %9 = xla_tuple %s7, %s8
  %s10 = sld [smem:[#allocation0]]
  $region93: #{tpu_custom_call.1} parent=0
    _
  %s12 = ssub.s32 1, %s10
  %s13 = scalar_select 0, %s12, %s10
  $region1: #{tpu_custom_call.1} parent=0
    #allocation2 [shape = 'u8[8192]{0}', space=vmem, size = 0x2000, scoped, tag = 'input window, operand 0']
    #allocation3 [shape = 's32[2]{0}', space=sflag, size = 0x8, scoped, tag = 'scoped memory for tpu_custom_call.1']
    #allocation4 [shape = 's32[2]{0}', space=sflag, size = 0x8, scoped, tag = 'scoped memory for tpu_custom_call.1']
    #allocation5 [shape = 'u8[8192]{0}', space=vmem, size = 0x2000, scoped, tag = 'input window, operand 1']
    #allocation6 [shape = 's32[2]{0}', space=sflag, size = 0x8, scoped, tag = 'scoped memory for tpu_custom_call.1']
    #allocation7 [shape = 'u8[16384]{0}', space=vmem, size = 0x4000, scoped, tag = 'input window, operand 2, single buffered']
    #allocation8 [shape = 'u8[16384]{0}', space=vmem, size = 0x4000, scoped, tag = 'input window, operand 3, single buffered']
    #allocation9 [shape = 's32[1]{0}', space=sflag, size = 0x4, scoped, tag = 'scoped memory for tpu_custom_call.1']
    #allocation10 [shape = 'u8[16384]{0}', space=vmem, size = 0x4000, scoped, tag = 'input window, operand 4, single buffered']
    #allocation11 [shape = 'u8[16384]{0}', space=vmem, size = 0x4000, scoped, tag = 'input window, operand 5, single buffered']
    #allocation12 [shape = 's32[1]{0}', space=sflag, size = 0x4, scoped, tag = 'scoped memory for tpu_custom_call.1']
    #allocation13 [shape = 'u8[8192]{0}', space=vmem, size = 0x2000, scoped, tag = 'output window, operand 0']
    #allocation14 [shape = 'u8[32768]{0}', space=vmem, size = 0x8000, scoped, tag = 'output window, operand 1']
    #allocation15 [shape = 's32[2]{0}', space=sflag, size = 0x8, scoped, tag = 'scoped memory for tpu_custom_call.1']
    %14 = vsyncpa [#allocation3], 0
    %s15 = scalar_lea.sflag [#allocation3], 1
    %16 = vsyncpa %s15, 0
    %17 = vsyncpa [#allocation6], 0
    %s18 = scalar_lea.sflag [#allocation6], 1
    %19 = vsyncpa %s18, 0
    %20 = vsyncpa [#allocation9], 0
    %21 = vsyncpa [#allocation12], 0
    %22 = vsyncpa [#allocation4], 0
    %s23 = scalar_lea.sflag [#allocation4], 1
    %24 = vsyncpa %s23, 0
    %25 = vsyncpa [#allocation15], 0
    %s26 = scalar_lea.sflag [#allocation15], 1
    %27 = vsyncpa %s26, 0
    loop: start=0, step=1, limit=4
    $region2: #{tpu_custom_call.1} parent=1 // loop_pre_header
      _
    $region3: #{tpu_custom_call.1} parent=1 // loop_header
      %s29 = sphi 0, %s33
      %p30 = scmp.ge.s32.totalorder %s29, 4
      %s39 = sphi 0, %s41
      %s42 = sphi 0, %s39
      %s43 = sphi 0, %s42
      %s59 = sphi 0, %s43
      %s65 = sphi 0, %s67
      %s68 = sphi 0, %s65
      %s69 = sphi 0, %s68
      %s85 = sphi 0, %s69
      %s89 = sphi 0, %s89
      %s91 = sphi 0, %s89
      %s92 = sphi 0, %s91
      %s106 = sphi 0, %s92
      %s110 = sphi 0, %s110
      %s112 = sphi 0, %s110
      %s113 = sphi 0, %s112
      %s127 = sphi 0, %s113
      %s131 = sphi 0, %s131
      %s133 = sphi 0, %s131
      %s134 = sphi 0, %s133
      %s148 = sphi 0, %s134
      %s152 = sphi 0, %s152
      %s154 = sphi 0, %s152
      %s155 = sphi 0, %s154
      %s169 = sphi 0, %s155
      %s173 = sphi 0, %s173
      %s175 = sphi 0, %s173
      %s176 = sphi 0, %s175
      %s190 = sphi 0, %s176
      %s196 = sphi 0, %s198
      %s199 = sphi 0, %s196
      %s200 = sphi 0, %s199
      %s216 = sphi 0, %s200
      %s222 = sphi 0, %s224
      %s225 = sphi 0, %s222
      %s226 = sphi 0, %s225
      %s242 = sphi 0, %s226
    $region4: #{tpu_custom_call.1} parent=1 // loop_header_branch
      %32 = sbr.rel (%p30) target = $region8
    $region5: #{tpu_custom_call.1} parent=1 // loop_body
      %s34 = ssub.s32 %s29, 1
      %s35 = ssub.s32 %s29, 2
      %s36 = sadd.s32 %s29, 1
      %s37 = ssub.s32 %s29, %s36
      %p38 = scmp.eq.s32.totalorder %s37, 0
      %s40 = sadd.s32 %s39, 1
      %s41 = scalar_select %p38, %s39, %s40
      %p44 = pneg %p38
      %p45 = scmp.eq.s32.totalorder %s29, 1
      %p46 = por %p44, %p45
      %p47 = scmp.ne.s32.totalorder %s39, %s42
      %p48 = scmp.eq.s32.totalorder %s29, 0
      %p49 = por %p47, %p48
      %p50 = scmp.ne.s32.totalorder %s39, %s42
      %p51 = scmp.eq.s32.totalorder %s34, 1
      %p52 = por %p50, %p51
      %p53 = scmp.ne.s32.totalorder %s42, %s43
      %p54 = scmp.eq.s32.totalorder %s34, 0
      %p55 = por %p53, %p54
      %p56 = scmp.ne.s32.totalorder %s42, %s43
      %p57 = scmp.eq.s32.totalorder %s35, 1
      %p58 = por %p56, %p57
      %p60 = scmp.ne.s32.totalorder %s43, %s59
      %p61 = scmp.eq.s32.totalorder %s35, 0
      %p62 = por %p60, %p61
      %s63 = ssub.s32 %s29, %s36
      %p64 = scmp.eq.s32.totalorder %s63, 0
      %s66 = sadd.s32 %s65, 1
      %s67 = scalar_select %p64, %s65, %s66
      %p70 = pneg %p64
      %p71 = scmp.eq.s32.totalorder %s29, 1
      %p72 = por %p70, %p71
      %p73 = scmp.ne.s32.totalorder %s65, %s68
      %p74 = scmp.eq.s32.totalorder %s29, 0
      %p75 = por %p73, %p74
      %p76 = scmp.ne.s32.totalorder %s65, %s68
      %p77 = scmp.eq.s32.totalorder %s34, 1
      %p78 = por %p76, %p77
      %p79 = scmp.ne.s32.totalorder %s68, %s69
      %p80 = scmp.eq.s32.totalorder %s34, 0
      %p81 = por %p79, %p80
      %p82 = scmp.ne.s32.totalorder %s68, %s69
      %p83 = scmp.eq.s32.totalorder %s35, 1
      %p84 = por %p82, %p83
      %p86 = scmp.ne.s32.totalorder %s69, %s85
      %p87 = scmp.eq.s32.totalorder %s35, 0
      %p88 = por %p86, %p87
      %s90 = sadd.s32 %s89, 1
      %p93 = scmp.eq.s32.totalorder %s29, 1
      %p94 = scmp.ne.s32.totalorder %s89, %s91
      %p95 = scmp.eq.s32.totalorder %s29, 0
      %p96 = por %p94, %p95
      %p97 = scmp.ne.s32.totalorder %s89, %s91
      %p98 = scmp.eq.s32.totalorder %s34, 1
      %p99 = por %p97, %p98
      %p100 = scmp.ne.s32.totalorder %s91, %s92
      %p101 = scmp.eq.s32.totalorder %s34, 0
      %p102 = por %p100, %p101
      %p103 = scmp.ne.s32.totalorder %s91, %s92
      %p104 = scmp.eq.s32.totalorder %s35, 1
      %p105 = por %p103, %p104
      %p107 = scmp.ne.s32.totalorder %s92, %s106
      %p108 = scmp.eq.s32.totalorder %s35, 0
      %p109 = por %p107, %p108
      %s111 = sadd.s32 %s110, 1
      %p114 = scmp.eq.s32.totalorder %s29, 1
      %p115 = scmp.ne.s32.totalorder %s110, %s112
      %p116 = scmp.eq.s32.totalorder %s29, 0
      %p117 = por %p115, %p116
      %p118 = scmp.ne.s32.totalorder %s110, %s112
      %p119 = scmp.eq.s32.totalorder %s34, 1
      %p120 = por %p118, %p119
      %p121 = scmp.ne.s32.totalorder %s112, %s113
      %p122 = scmp.eq.s32.totalorder %s34, 0
      %p123 = por %p121, %p122
      %p124 = scmp.ne.s32.totalorder %s112, %s113
      %p125 = scmp.eq.s32.totalorder %s35, 1
      %p126 = por %p124, %p125
      %p128 = scmp.ne.s32.totalorder %s113, %s127
      %p129 = scmp.eq.s32.totalorder %s35, 0
      %p130 = por %p128, %p129
      %s132 = sadd.s32 %s131, 1
      %p135 = scmp.eq.s32.totalorder %s29, 1
      %p136 = scmp.ne.s32.totalorder %s131, %s133
      %p137 = scmp.eq.s32.totalorder %s29, 0
      %p138 = por %p136, %p137
      %p139 = scmp.ne.s32.totalorder %s131, %s133
      %p140 = scmp.eq.s32.totalorder %s34, 1
      %p141 = por %p139, %p140
      %p142 = scmp.ne.s32.totalorder %s133, %s134
      %p143 = scmp.eq.s32.totalorder %s34, 0
      %p144 = por %p142, %p143
      %p145 = scmp.ne.s32.totalorder %s133, %s134
      %p146 = scmp.eq.s32.totalorder %s35, 1
      %p147 = por %p145, %p146
      %p149 = scmp.ne.s32.totalorder %s134, %s148
      %p150 = scmp.eq.s32.totalorder %s35, 0
      %p151 = por %p149, %p150
      %s153 = sadd.s32 %s152, 1
      %p156 = scmp.eq.s32.totalorder %s29, 1
      %p157 = scmp.ne.s32.totalorder %s152, %s154
      %p158 = scmp.eq.s32.totalorder %s29, 0
      %p159 = por %p157, %p158
      %p160 = scmp.ne.s32.totalorder %s152, %s154
      %p161 = scmp.eq.s32.totalorder %s34, 1
      %p162 = por %p160, %p161
      %p163 = scmp.ne.s32.totalorder %s154, %s155
      %p164 = scmp.eq.s32.totalorder %s34, 0
      %p165 = por %p163, %p164
      %p166 = scmp.ne.s32.totalorder %s154, %s155
      %p167 = scmp.eq.s32.totalorder %s35, 1
      %p168 = por %p166, %p167
      %p170 = scmp.ne.s32.totalorder %s155, %s169
      %p171 = scmp.eq.s32.totalorder %s35, 0
      %p172 = por %p170, %p171
      %s174 = sadd.s32 %s173, 1
      %p177 = scmp.eq.s32.totalorder %s29, 1
      %p178 = scmp.ne.s32.totalorder %s173, %s175
      %p179 = scmp.eq.s32.totalorder %s29, 0
      %p180 = por %p178, %p179
      %p181 = scmp.ne.s32.totalorder %s173, %s175
      %p182 = scmp.eq.s32.totalorder %s34, 1
      %p183 = por %p181, %p182
      %p184 = scmp.ne.s32.totalorder %s175, %s176
      %p185 = scmp.eq.s32.totalorder %s34, 0
      %p186 = por %p184, %p185
      %p187 = scmp.ne.s32.totalorder %s175, %s176
      %p188 = scmp.eq.s32.totalorder %s35, 1
      %p189 = por %p187, %p188
      %p191 = scmp.ne.s32.totalorder %s176, %s190
      %p192 = scmp.eq.s32.totalorder %s35, 0
      %p193 = por %p191, %p192
      %s194 = ssub.s32 %s29, %s36
      %p195 = scmp.eq.s32.totalorder %s194, 0
      %s197 = sadd.s32 %s196, 1
      %s198 = scalar_select %p195, %s196, %s197
      %p201 = pneg %p195
      %p202 = scmp.eq.s32.totalorder %s29, 1
      %p203 = por %p201, %p202
      %p204 = scmp.ne.s32.totalorder %s196, %s199
      %p205 = scmp.eq.s32.totalorder %s29, 0
      %p206 = por %p204, %p205
      %p207 = scmp.ne.s32.totalorder %s196, %s199
      %p208 = scmp.eq.s32.totalorder %s34, 1
      %p209 = por %p207, %p208
      %p210 = scmp.ne.s32.totalorder %s199, %s200
      %p211 = scmp.eq.s32.totalorder %s34, 0
      %p212 = por %p210, %p211
      %p213 = scmp.ne.s32.totalorder %s199, %s200
      %p214 = scmp.eq.s32.totalorder %s35, 1
      %p215 = por %p213, %p214
      %p217 = scmp.ne.s32.totalorder %s200, %s216
      %p218 = scmp.eq.s32.totalorder %s35, 0
      %p219 = por %p217, %p218
      %s220 = ssub.s32 %s29, %s36
      %p221 = scmp.eq.s32.totalorder %s220, 0
      %s223 = sadd.s32 %s222, 1
      %s224 = scalar_select %p221, %s222, %s223
      %p227 = pneg %p221
      %p228 = scmp.eq.s32.totalorder %s29, 1
      %p229 = por %p227, %p228
      %p230 = scmp.ne.s32.totalorder %s222, %s225
      %p231 = scmp.eq.s32.totalorder %s29, 0
      %p232 = por %p230, %p231
      %p233 = scmp.ne.s32.totalorder %s222, %s225
      %p234 = scmp.eq.s32.totalorder %s34, 1
      %p235 = por %p233, %p234
      %p236 = scmp.ne.s32.totalorder %s225, %s226
      %p237 = scmp.eq.s32.totalorder %s34, 0
      %p238 = por %p236, %p237
      %p239 = scmp.ne.s32.totalorder %s225, %s226
      %p240 = scmp.eq.s32.totalorder %s35, 1
      %p241 = por %p239, %p240
      %p243 = scmp.ne.s32.totalorder %s226, %s242
      %p244 = scmp.eq.s32.totalorder %s35, 0
      %p245 = por %p243, %p244
      %p246 = scmp.le.s32.totalorder 1, %s29
      %p247 = scmp.lt.s32.totalorder %s29, 3
      %p248 = pnand %p246, %p247
      %p249 = pneg %p248
      // Predicated region
      $region9: #{tpu_custom_call.1} parent=5 // pred_check
        _
      $region10: #{tpu_custom_call.1} parent=5 // pred_check_branch
        %251 = sbr.rel (%p248) target = $region12
      $region11: #{tpu_custom_call.1} parent=5 // pred_region
        %s252 = ssub.s32 %s29, 1
        // Predicated region
        $region13: #{tpu_custom_call.1} parent=11 // pred_check
          %p253 = pneg %p102
        $region14: #{tpu_custom_call.1} parent=11 // pred_check_branch
          %255 = sbr.rel (%p253) target = $region16
        $region15: #{tpu_custom_call.1} parent=11 // pred_region
          %s257 = ssub.s32 512, 512
          %258 = vsyncadd [#allocation6], %s257
          %s259 = sshll.u32 [#allocation7], 4
          %s260 = int_to_ptr.vmem [resolvable:$true] %s259
          %265 = dma.hbm_to_vmem [thread:$0]  %s2, 512, %s260, [#allocation6], 128, 128, 8
        $region16: #{tpu_custom_call.1} parent=11 // pred_fallthru
          _
        // Predicated region
        $region17: #{tpu_custom_call.1} parent=11 // pred_check
          %p266 = pneg %p123
        $region18: #{tpu_custom_call.1} parent=11 // pred_check_branch
          %268 = sbr.rel (%p266) target = $region20
        $region19: #{tpu_custom_call.1} parent=11 // pred_region
          %s270 = ssub.s32 512, 512
          %271 = vsyncadd [#allocation9], %s270
          %s272 = sshll.u32 [#allocation8], 4
          %s273 = int_to_ptr.vmem [resolvable:$true] %s272
          %278 = dma.hbm_to_vmem [thread:$0]  %s3, 512, %s273, [#allocation9], 128, 128, 8
        $region20: #{tpu_custom_call.1} parent=11 // pred_fallthru
          _
        // Predicated region
        $region21: #{tpu_custom_call.1} parent=11 // pred_check
          %p279 = pneg %p144
        $region22: #{tpu_custom_call.1} parent=11 // pred_check_branch
          %281 = sbr.rel (%p279) target = $region24
        $region23: #{tpu_custom_call.1} parent=11 // pred_region
          %s283 = ssub.s32 512, 512
          %284 = vsyncadd [#allocation9], %s283
          %s285 = sshll.u32 [#allocation10], 4
          %s286 = int_to_ptr.vmem [resolvable:$true] %s285
          %291 = dma.hbm_to_vmem [thread:$0]  %s4, 512, %s286, [#allocation9], 128, 128, 8
        $region24: #{tpu_custom_call.1} parent=11 // pred_fallthru
          _
        // Predicated region
        $region25: #{tpu_custom_call.1} parent=11 // pred_check
          %p292 = pneg %p165
        $region26: #{tpu_custom_call.1} parent=11 // pred_check_branch
          %294 = sbr.rel (%p292) target = $region28
        $region27: #{tpu_custom_call.1} parent=11 // pred_region
          %s296 = ssub.s32 512, 512
          %297 = vsyncadd [#allocation12], %s296
          %s298 = sshll.u32 [#allocation11], 4
          %s299 = int_to_ptr.vmem [resolvable:$true] %s298
          %304 = dma.hbm_to_vmem [thread:$0]  %s5, 512, %s299, [#allocation12], 128, 128, 8
        $region28: #{tpu_custom_call.1} parent=11 // pred_fallthru
          _
        // Predicated region
        $region29: #{tpu_custom_call.1} parent=11 // pred_check
          %p305 = pneg %p186
        $region30: #{tpu_custom_call.1} parent=11 // pred_check_branch
          %307 = sbr.rel (%p305) target = $region32
        $region31: #{tpu_custom_call.1} parent=11 // pred_region
          _
        $region32: #{tpu_custom_call.1} parent=11 // pred_fallthru
          _
      $region12: #{tpu_custom_call.1} parent=5 // pred_fallthru
        _
      %p308 = scmp.lt.s32.totalorder %s29, 2
      // Predicated region
      $region33: #{tpu_custom_call.1} parent=5 // pred_check
        %p309 = pneg %p308
      $region34: #{tpu_custom_call.1} parent=5 // pred_check_branch
        %311 = sbr.rel (%p309) target = $region36
      $region35: #{tpu_custom_call.1} parent=5 // pred_region
        // Predicated region
        $region37: #{tpu_custom_call.1} parent=35 // pred_check
          %p312 = pneg %p49
        $region38: #{tpu_custom_call.1} parent=35 // pred_check_branch
          %314 = sbr.rel (%p312) target = $region40
        $region39: #{tpu_custom_call.1} parent=35 // pred_region
          %s315 = sand.u32 %s39, 1
          %s316 = scalar_lea.sflag [#allocation3], %s315
          %s317 = sand.u32 %s39, 1
          %s318 = smul.addr %s317, 8
          %s319 = scalar_lea.vmem [#allocation2], %s318
          %s321 = ssub.s32 128, 128
          %322 = vsyncadd %s316, %s321
          %s323 = smul.addr %s29, 128
          %s324 = scalar_lea.hbm %s0, %s323
          %s326 = sshll.u32 %s319, 4
          %s327 = int_to_ptr.vmem [resolvable:$true] %s326
          %329 = dma.hbm_to_vmem [thread:$0]  %s324, 128, %s327, %s316
        $region40: #{tpu_custom_call.1} parent=35 // pred_fallthru
          _
        // Predicated region
        $region41: #{tpu_custom_call.1} parent=35 // pred_check
          %p330 = pneg %p75
        $region42: #{tpu_custom_call.1} parent=35 // pred_check_branch
          %332 = sbr.rel (%p330) target = $region44
        $region43: #{tpu_custom_call.1} parent=35 // pred_region
          %s333 = sand.u32 %s29, 1
          %s334 = scalar_lea.sflag [#allocation6], %s333
          %s335 = sand.u32 %s65, 1
          %s336 = smul.addr %s335, 8
          %s337 = scalar_lea.vmem [#allocation5], %s336
          %s339 = ssub.s32 128, 128
          %340 = vsyncadd %s334, %s339
          %s341 = smul.addr %s29, 128
          %s342 = scalar_lea.hbm %s1, %s341
          %s344 = sshll.u32 %s337, 4
          %s345 = int_to_ptr.vmem [resolvable:$true] %s344
          %347 = dma.hbm_to_vmem [thread:$0]  %s342, 128, %s345, %s334
        $region44: #{tpu_custom_call.1} parent=35 // pred_fallthru
          _
      $region36: #{tpu_custom_call.1} parent=5 // pred_fallthru
        _
      %p348 = scmp.le.s32.totalorder 1, %s29
      %p349 = scmp.lt.s32.totalorder %s29, 3
      %p350 = pnand %p348, %p349
      %p351 = pneg %p350
      // Predicated region
      $region45: #{tpu_custom_call.1} parent=5 // pred_check
        _
      $region46: #{tpu_custom_call.1} parent=5 // pred_check_branch
        %353 = sbr.rel (%p350) target = $region48
      $region47: #{tpu_custom_call.1} parent=5 // pred_region
        %s354 = ssub.s32 %s29, 1
        %s355 = sand.u32 %s42, 1
        %s356 = scalar_lea.sflag [#allocation3], %s355
        %s357 = sand.u32 %s42, 1
        %s358 = smul.addr %s357, 8
        %s359 = scalar_lea.vmem [#allocation2], %s358
        // Predicated region
        $region49: #{tpu_custom_call.1} parent=47 // pred_check
          %p360 = pneg %p55
        $region50: #{tpu_custom_call.1} parent=47 // pred_check_branch
          %362 = sbr.rel (%p360) target = $region52
        $region51: #{tpu_custom_call.1} parent=47 // pred_region
          %363 = dma.done %s356, 128
        $region52: #{tpu_custom_call.1} parent=47 // pred_fallthru
          _
        %s364 = sand.u32 %s34, 1
        %s365 = scalar_lea.sflag [#allocation6], %s364
        %s366 = sand.u32 %s68, 1
        %s367 = smul.addr %s366, 8
        %s368 = scalar_lea.vmem [#allocation5], %s367
        // Predicated region
        $region53: #{tpu_custom_call.1} parent=47 // pred_check
          %p369 = pneg %p81
        $region54: #{tpu_custom_call.1} parent=47 // pred_check_branch
          %371 = sbr.rel (%p369) target = $region56
        $region55: #{tpu_custom_call.1} parent=47 // pred_region
          %372 = dma.done %s365, 128
        $region56: #{tpu_custom_call.1} parent=47 // pred_fallthru
          _
        // Predicated region
        $region57: #{tpu_custom_call.1} parent=47 // pred_check
          %p373 = pneg %p102
        $region58: #{tpu_custom_call.1} parent=47 // pred_check_branch
          %375 = sbr.rel (%p373) target = $region60
        $region59: #{tpu_custom_call.1} parent=47 // pred_region
          %376 = dma.done [#allocation6], 512
        $region60: #{tpu_custom_call.1} parent=47 // pred_fallthru
          _
        // Predicated region
        $region61: #{tpu_custom_call.1} parent=47 // pred_check
          %p377 = pneg %p123
        $region62: #{tpu_custom_call.1} parent=47 // pred_check_branch
          %379 = sbr.rel (%p377) target = $region64
        $region63: #{tpu_custom_call.1} parent=47 // pred_region
          %380 = dma.done [#allocation9], 512
        $region64: #{tpu_custom_call.1} parent=47 // pred_fallthru
          _
        // Predicated region
        $region65: #{tpu_custom_call.1} parent=47 // pred_check
          %p381 = pneg %p144
        $region66: #{tpu_custom_call.1} parent=47 // pred_check_branch
          %383 = sbr.rel (%p381) target = $region68
        $region67: #{tpu_custom_call.1} parent=47 // pred_region
          %384 = dma.done [#allocation9], 512
        $region68: #{tpu_custom_call.1} parent=47 // pred_fallthru
          _
        // Predicated region
        $region69: #{tpu_custom_call.1} parent=47 // pred_check
          %p385 = pneg %p165
        $region70: #{tpu_custom_call.1} parent=47 // pred_check_branch
          %387 = sbr.rel (%p385) target = $region72
        $region71: #{tpu_custom_call.1} parent=47 // pred_region
          %388 = dma.done [#allocation12], 512
        $region72: #{tpu_custom_call.1} parent=47 // pred_fallthru
          _
        %s389 = sand.u32 %s42, 1
        %s390 = scalar_lea.sflag [#allocation3], %s389
        %s391 = sand.u32 %s42, 1
        %s392 = smul.addr %s391, 8
        %s393 = scalar_lea.vmem [#allocation2], %s392
        %p394 = pneg %p55
        %p395 = pneg %p52
        %s396 = sand.u32 %s34, 1
        %s397 = scalar_lea.sflag [#allocation6], %s396
        %s398 = sand.u32 %s68, 1
        %s399 = smul.addr %s398, 8
        %s400 = scalar_lea.vmem [#allocation5], %s399
        %p401 = pneg %p81
        %p402 = pneg %p78
        %p403 = pneg %p102
        %p404 = pneg %p99
        %p405 = pneg %p123
        %p406 = pneg %p120
        %p407 = pneg %p144
        %p408 = pneg %p141
        %p409 = pneg %p165
        %p410 = pneg %p162
        %p411 = pneg %p186
        %p412 = pneg %p183
        %p413 = pneg %p212
        %p414 = pneg %p209
        %s415 = sand.u32 %s199, 1
        %s416 = scalar_lea.sflag [#allocation4], %s415
        %s417 = sand.u32 %s199, 1
        %s418 = smul.addr %s417, 8
        %s419 = scalar_lea.vmem [#allocation13], %s418
        %p420 = pneg %p238
        %p421 = pneg %p235
        %s422 = sand.u32 %s225, 1
        %s423 = scalar_lea.sflag [#allocation15], %s422
        %s424 = sand.u32 %s225, 1
        %s425 = smul.addr %s424, 32
        %s426 = scalar_lea.vmem [#allocation14], %s425
        %v427 = vld [vmem:[%s359] sm:$0xff]
        %v428 = vld [vmem:[%s368] sm:$0xff]
        %v429 = vld [vmem:[#allocation7] sm:$0xff]
        %v430 = vld [vmem:[#allocation7 + $0x8] sm:$0xff]
        %v431 = vld [vmem:[#allocation7 + $0x10] sm:$0xff]
        %v432 = vld [vmem:[#allocation7 + $0x18] sm:$0xff]
        %vm433 = vcmask 261120
        %v435 = vsel %vm433, %v427, 0
        %437 = vmatprep.subr.mxu0 0.0
        %438 = vmatpush1.msra.mxu0 %v429
        %439 = vmatprep.subr.mxu0 0.0
        %440 = vmatpush1.msra.mxu0 %v430
        %441 = vmatprep.subr.mxu0 0.0
        %442 = vmatpush1.msra.mxu0 %v431
        %443 = vmatprep.subr.mxu0 0.0
        %444 = vmatpush1.msra.mxu0 %v432
        %445 = vmatprep.subr.mxu0 0.0
        %446 = vmatpush1.msra.mxu0 0.0
        %447 = vmatprep.subr.mxu0 0.0
        %448 = vmatpush1.msra.mxu0 0.0
        %449 = vmatprep.subr.mxu0 0.0
        %450 = vmatpush1.msra.mxu0 0.0
        %451 = vmatprep.subr.mxu0 0.0
        %452 = vmatpush1.msra.mxu0 0.0
        %453 = vmatprep.subr.mxu0 0.0
        %454 = vmatpush1.msra.mxu0 0.0
        %455 = vmatprep.subr.mxu0 0.0
        %456 = vmatpush1.msra.mxu0 0.0
        %457 = vmatprep.subr.mxu0 0.0
        %458 = vmatpush1.msra.mxu0 0.0
        %459 = vmatprep.subr.mxu0 0.0
        %460 = vmatpush1.msra.mxu0 0.0
        %461 = vmatprep.subr.mxu0 0.0
        %462 = vmatpush1.msra.mxu0 0.0
        %463 = vmatprep.subr.mxu0 0.0
        %464 = vmatpush1.msra.mxu0 0.0
        %465 = vmatprep.subr.mxu0 0.0
        %466 = vmatpush1.msra.mxu0 0.0
        %467 = vmatprep.subr.mxu0 0.0
        %468 = vmatpush1.msra.mxu0 0.0
        %469 = vmatprep.subr.mxu0 0.0
        %470 = vmatpush1.msra.mxu0 0.0
        %471 = vmatprep.subr.mxu0 0.0
        %472 = vmatpush1.msra.mxu0 0.0
        %473 = vmatprep.subr.mxu0 0.0
        %474 = vmatpush1.msra.mxu0 0.0
        %475 = vmatprep.subr.mxu0 0.0
        %476 = vmatpush1.msra.mxu0 0.0
        %477 = vmatprep.subr.mxu0 0.0
        %478 = vmatpush1.msra.mxu0 0.0
        %479 = vmatprep.subr.mxu0 0.0
        %480 = vmatpush1.msra.mxu0 0.0
        %481 = vmatprep.subr.mxu0 0.0
        %482 = vmatpush1.msra.mxu0 0.0
        %483 = vmatprep.subr.mxu0 0.0
        %484 = vmatpush1.msra.mxu0 0.0
        %485 = vmatprep.subr.mxu0 0.0
        %486 = vmatpush1.msra.mxu0 0.0
        %487 = vmatprep.subr.mxu0 0.0
        %488 = vmatpush1.msra.mxu0 0.0
        %489 = vmatprep.subr.mxu0 0.0
        %490 = vmatpush1.msra.mxu0 0.0
        %491 = vmatprep.subr.mxu0 0.0
        %492 = vmatpush1.msra.mxu0 0.0
        %493 = vmatprep.subr.mxu0 0.0
        %494 = vmatpush1.msra.mxu0 0.0
        %495 = vmatprep.subr.mxu0 0.0
        %496 = vmatpush1.msra.mxu0 0.0
        %497 = vmatprep.subr.mxu0 0.0
        %498 = vmatpush1.msra.mxu0 0.0
        %499 = vmatprep.subr.mxu0 0.0
        %500 = vmatpush1.msra.mxu0 0.0
        %501 = vmatprep.mubr.f32.mxu0 0.0
        %502 = vmatmul.mubr.f32.gmra.mrb[0].mxu0 %v435
        %v503 = vpop.f32.mrb[0].mxu0
        %v504 = vadd.f32 0.0, %v503
        %v505 = vpop.f32.mrb[0].mxu0
        %506 = vdwg.mxu0
        %v507 = vld [vmem:[#allocation8] sm:$0xff]
        %v508 = vld [vmem:[#allocation8 + $0x8] sm:$0xff]
        %v509 = vld [vmem:[#allocation8 + $0x10] sm:$0xff]
        %v510 = vld [vmem:[#allocation8 + $0x18] sm:$0xff]
        %v512 = vsel %vm433, %v428, 0
        %514 = vmatprep.subr.mxu0 0.0
        %515 = vmatpush1.msra.mxu0 %v507
        %516 = vmatprep.subr.mxu0 0.0
        %517 = vmatpush1.msra.mxu0 %v508
        %518 = vmatprep.subr.mxu0 0.0
        %519 = vmatpush1.msra.mxu0 %v509
        %520 = vmatprep.subr.mxu0 0.0
        %521 = vmatpush1.msra.mxu0 %v510
        %522 = vmatprep.subr.mxu0 0.0
        %523 = vmatpush1.msra.mxu0 0.0
        %524 = vmatprep.subr.mxu0 0.0
        %525 = vmatpush1.msra.mxu0 0.0
        %526 = vmatprep.subr.mxu0 0.0
        %527 = vmatpush1.msra.mxu0 0.0
        %528 = vmatprep.subr.mxu0 0.0
        %529 = vmatpush1.msra.mxu0 0.0
        %530 = vmatprep.subr.mxu0 0.0
        %531 = vmatpush1.msra.mxu0 0.0
        %532 = vmatprep.subr.mxu0 0.0
        %533 = vmatpush1.msra.mxu0 0.0
        %534 = vmatprep.subr.mxu0 0.0
        %535 = vmatpush1.msra.mxu0 0.0
        %536 = vmatprep.subr.mxu0 0.0
        %537 = vmatpush1.msra.mxu0 0.0
        %538 = vmatprep.subr.mxu0 0.0
        %539 = vmatpush1.msra.mxu0 0.0
        %540 = vmatprep.subr.mxu0 0.0
        %541 = vmatpush1.msra.mxu0 0.0
        %542 = vmatprep.subr.mxu0 0.0
        %543 = vmatpush1.msra.mxu0 0.0
        %544 = vmatprep.subr.mxu0 0.0
        %545 = vmatpush1.msra.mxu0 0.0
        %546 = vmatprep.subr.mxu0 0.0
        %547 = vmatpush1.msra.mxu0 0.0
        %548 = vmatprep.subr.mxu0 0.0
        %549 = vmatpush1.msra.mxu0 0.0
        %550 = vmatprep.subr.mxu0 0.0
        %551 = vmatpush1.msra.mxu0 0.0
        %552 = vmatprep.subr.mxu0 0.0
        %553 = vmatpush1.msra.mxu0 0.0
        %554 = vmatprep.subr.mxu0 0.0
        %555 = vmatpush1.msra.mxu0 0.0
        %556 = vmatprep.subr.mxu0 0.0
        %557 = vmatpush1.msra.mxu0 0.0
        %558 = vmatprep.subr.mxu0 0.0
        %559 = vmatpush1.msra.mxu0 0.0
        %560 = vmatprep.subr.mxu0 0.0
        %561 = vmatpush1.msra.mxu0 0.0
        %562 = vmatprep.subr.mxu0 0.0
        %563 = vmatpush1.msra.mxu0 0.0
        %564 = vmatprep.subr.mxu0 0.0
        %565 = vmatpush1.msra.mxu0 0.0
        %566 = vmatprep.subr.mxu0 0.0
        %567 = vmatpush1.msra.mxu0 0.0
        %568 = vmatprep.subr.mxu0 0.0
        %569 = vmatpush1.msra.mxu0 0.0
        %570 = vmatprep.subr.mxu0 0.0
        %571 = vmatpush1.msra.mxu0 0.0
        %572 = vmatprep.subr.mxu0 0.0
        %573 = vmatpush1.msra.mxu0 0.0
        %574 = vmatprep.subr.mxu0 0.0
        %575 = vmatpush1.msra.mxu0 0.0
        %576 = vmatprep.subr.mxu0 0.0
        %577 = vmatpush1.msra.mxu0 0.0
        %578 = vmatprep.mubr.f32.mxu0 0.0
        %579 = vmatmul.mubr.f32.gmra.mrb[0].mxu0 %v512
        %v580 = vpop.f32.mrb[0].mxu0
        %v581 = vadd.f32 0.0, %v580
        %v582 = vpop.f32.mrb[0].mxu0
        %583 = vdwg.mxu0
        %v584 = vld [vmem:[#allocation10] sm:$0xff]
        %v585 = vld [vmem:[#allocation10 + $0x8] sm:$0xff]
        %v586 = vld [vmem:[#allocation10 + $0x10] sm:$0xff]
        %v587 = vld [vmem:[#allocation10 + $0x18] sm:$0xff]
        %588 = vmatprep.subr.mxu0 0.0
        %589 = vmatpush1.msra.mxu0 %v584
        %590 = vmatprep.subr.mxu0 0.0
        %591 = vmatpush1.msra.mxu0 %v585
        %592 = vmatprep.subr.mxu0 0.0
        %593 = vmatpush1.msra.mxu0 %v586
        %594 = vmatprep.subr.mxu0 0.0
        %595 = vmatpush1.msra.mxu0 %v587
        %596 = vmatprep.subr.mxu0 0.0
        %597 = vmatpush1.msra.mxu0 0.0
        %598 = vmatprep.subr.mxu0 0.0
        %599 = vmatpush1.msra.mxu0 0.0
        %600 = vmatprep.subr.mxu0 0.0
        %601 = vmatpush1.msra.mxu0 0.0
        %602 = vmatprep.subr.mxu0 0.0
        %603 = vmatpush1.msra.mxu0 0.0
        %604 = vmatprep.subr.mxu0 0.0
        %605 = vmatpush1.msra.mxu0 0.0
        %606 = vmatprep.subr.mxu0 0.0
        %607 = vmatpush1.msra.mxu0 0.0
        %608 = vmatprep.subr.mxu0 0.0
        %609 = vmatpush1.msra.mxu0 0.0
        %610 = vmatprep.subr.mxu0 0.0
        %611 = vmatpush1.msra.mxu0 0.0
        %612 = vmatprep.subr.mxu0 0.0
        %613 = vmatpush1.msra.mxu0 0.0
        %614 = vmatprep.subr.mxu0 0.0
        %615 = vmatpush1.msra.mxu0 0.0
        %616 = vmatprep.subr.mxu0 0.0
        %617 = vmatpush1.msra.mxu0 0.0
        %618 = vmatprep.subr.mxu0 0.0
        %619 = vmatpush1.msra.mxu0 0.0
        %620 = vmatprep.subr.mxu0 0.0
        %621 = vmatpush1.msra.mxu0 0.0
        %622 = vmatprep.subr.mxu0 0.0
        %623 = vmatpush1.msra.mxu0 0.0
        %624 = vmatprep.subr.mxu0 0.0
        %625 = vmatpush1.msra.mxu0 0.0
        %626 = vmatprep.subr.mxu0 0.0
        %627 = vmatpush1.msra.mxu0 0.0
        %628 = vmatprep.subr.mxu0 0.0
        %629 = vmatpush1.msra.mxu0 0.0
        %630 = vmatprep.subr.mxu0 0.0
        %631 = vmatpush1.msra.mxu0 0.0
        %632 = vmatprep.subr.mxu0 0.0
        %633 = vmatpush1.msra.mxu0 0.0
        %634 = vmatprep.subr.mxu0 0.0
        %635 = vmatpush1.msra.mxu0 0.0
        %636 = vmatprep.subr.mxu0 0.0
        %637 = vmatpush1.msra.mxu0 0.0
        %638 = vmatprep.subr.mxu0 0.0
        %639 = vmatpush1.msra.mxu0 0.0
        %640 = vmatprep.subr.mxu0 0.0
        %641 = vmatpush1.msra.mxu0 0.0
        %642 = vmatprep.subr.mxu0 0.0
        %643 = vmatpush1.msra.mxu0 0.0
        %644 = vmatprep.subr.mxu0 0.0
        %645 = vmatpush1.msra.mxu0 0.0
        %646 = vmatprep.subr.mxu0 0.0
        %647 = vmatpush1.msra.mxu0 0.0
        %648 = vmatprep.subr.mxu0 0.0
        %649 = vmatpush1.msra.mxu0 0.0
        %650 = vmatprep.subr.mxu0 0.0
        %651 = vmatpush1.msra.mxu0 0.0
        %652 = vmatprep.mubr.f32.mxu0 0.0
        %653 = vmatmul.mubr.f32.gmra.mrb[0].mxu0 %v512
        %v654 = vpop.f32.mrb[0].mxu0
        %v655 = vadd.f32 0.0, %v654
        %v656 = vpop.f32.mrb[0].mxu0
        %657 = vdwg.mxu0
        %vm658 = vcmask 64512
        %v660 = vsel %vm658, %v504, 0
        %v663 = vsel %vm658, %v581, 0
        %665 = vmatprep.subr.mxu0 0.0
        %666 = vmatpush1.xpose.msra.mxu0 %v663
        %667 = vmatprep.subr.mxu0 0.0
        %668 = vmatpush1.xpose.msra.mxu0 0.0
        %669 = vmatprep.subr.mxu0 0.0
        %670 = vmatpush1.xpose.msra.mxu0 0.0
        %671 = vmatprep.subr.mxu0 0.0
        %672 = vmatpush1.xpose.msra.mxu0 0.0
        %673 = vmatprep.subr.mxu0 0.0
        %674 = vmatpush1.xpose.msra.mxu0 0.0
        %675 = vmatprep.subr.mxu0 0.0
        %676 = vmatpush1.xpose.msra.mxu0 0.0
        %677 = vmatprep.subr.mxu0 0.0
        %678 = vmatpush1.xpose.msra.mxu0 0.0
        %679 = vmatprep.subr.mxu0 0.0
        %680 = vmatpush1.xpose.msra.mxu0 0.0
        %681 = vmatprep.subr.mxu0 0.0
        %682 = vmatpush1.xpose.msra.mxu0 0.0
        %683 = vmatprep.subr.mxu0 0.0
        %684 = vmatpush1.xpose.msra.mxu0 0.0
        %685 = vmatprep.subr.mxu0 0.0
        %686 = vmatpush1.xpose.msra.mxu0 0.0
        %687 = vmatprep.subr.mxu0 0.0
        %688 = vmatpush1.xpose.msra.mxu0 0.0
        %689 = vmatprep.subr.mxu0 0.0
        %690 = vmatpush1.xpose.msra.mxu0 0.0
        %691 = vmatprep.subr.mxu0 0.0
        %692 = vmatpush1.xpose.msra.mxu0 0.0
        %693 = vmatprep.subr.mxu0 0.0
        %694 = vmatpush1.xpose.msra.mxu0 0.0
        %695 = vmatprep.subr.mxu0 0.0
        %696 = vmatpush1.xpose.msra.mxu0 0.0
        %697 = vmatprep.subr.mxu0 0.0
        %698 = vmatpush1.xpose.msra.mxu0 0.0
        %699 = vmatprep.subr.mxu0 0.0
        %700 = vmatpush1.xpose.msra.mxu0 0.0
        %701 = vmatprep.subr.mxu0 0.0
        %702 = vmatpush1.xpose.msra.mxu0 0.0
        %703 = vmatprep.subr.mxu0 0.0
        %704 = vmatpush1.xpose.msra.mxu0 0.0
        %705 = vmatprep.subr.mxu0 0.0
        %706 = vmatpush1.xpose.msra.mxu0 0.0
        %707 = vmatprep.subr.mxu0 0.0
        %708 = vmatpush1.xpose.msra.mxu0 0.0
        %709 = vmatprep.subr.mxu0 0.0
        %710 = vmatpush1.xpose.msra.mxu0 0.0
        %711 = vmatprep.subr.mxu0 0.0
        %712 = vmatpush1.xpose.msra.mxu0 0.0
        %713 = vmatprep.subr.mxu0 0.0
        %714 = vmatpush1.xpose.msra.mxu0 0.0
        %715 = vmatprep.subr.mxu0 0.0
        %716 = vmatpush1.xpose.msra.mxu0 0.0
        %717 = vmatprep.subr.mxu0 0.0
        %718 = vmatpush1.xpose.msra.mxu0 0.0
        %719 = vmatprep.subr.mxu0 0.0
        %720 = vmatpush1.xpose.msra.mxu0 0.0
        %721 = vmatprep.subr.mxu0 0.0
        %722 = vmatpush1.xpose.msra.mxu0 0.0
        %723 = vmatprep.subr.mxu0 0.0
        %724 = vmatpush1.xpose.msra.mxu0 0.0
        %725 = vmatprep.subr.mxu0 0.0
        %726 = vmatpush1.xpose.msra.mxu0 0.0
        %727 = vmatprep.subr.mxu0 0.0
        %728 = vmatpush1.xpose.msra.mxu0 0.0
        %729 = vmatprep.mubr.f32.mxu0 0.0
        %730 = vmatmul.mubr.f32.gmra.mrb[0].mxu0 %v660
        %v731 = vpop.f32.mrb[0].mxu0
        %v732 = vadd.f32 0.0, %v731
        %v733 = vpop.f32.mrb[0].mxu0
        %734 = vdwg.mxu0
        %v735 = vsel %vm658, %v732, -inf
        %736 = vmax.xlane.f32.xlu0 %v735
        %v737 = vpop.xlane.xlu0 %736
        %v738 = vsub.f32 %v732, %v737
        %v739 = vmul.f32 %v738, 1.442695
        %v740 = vpow.pop %v739
        %v741 = vsel %vm658, %v740, 0.0
        %742 = vadd.xlane.f32.xlu0 %v741
        %v743 = vpop.xlane.xlu0 %742
        %v744 = vrcp.pop %v743
        %v745 = vmul.f32 %v740, %v744
        %746 = vst.msk [vmem:[%s426] sm:$0xff] %vm658, %v745
        %v748 = vsel %vm658, %v745, 0
        %750 = vmatprep.subr.mxu0 0.0
        %751 = vmatpush1.msra.mxu0 %v655
        %752 = vmatprep.subr.mxu0 0.0
        %753 = vmatpush1.msra.mxu0 0.0
        %754 = vmatprep.subr.mxu0 0.0
        %755 = vmatpush1.msra.mxu0 0.0
        %756 = vmatprep.subr.mxu0 0.0
        %757 = vmatpush1.msra.mxu0 0.0
        %758 = vmatprep.subr.mxu0 0.0
        %759 = vmatpush1.msra.mxu0 0.0
        %760 = vmatprep.subr.mxu0 0.0
        %761 = vmatpush1.msra.mxu0 0.0
        %762 = vmatprep.subr.mxu0 0.0
        %763 = vmatpush1.msra.mxu0 0.0
        %764 = vmatprep.subr.mxu0 0.0
        %765 = vmatpush1.msra.mxu0 0.0
        %766 = vmatprep.subr.mxu0 0.0
        %767 = vmatpush1.msra.mxu0 0.0
        %768 = vmatprep.subr.mxu0 0.0
        %769 = vmatpush1.msra.mxu0 0.0
        %770 = vmatprep.subr.mxu0 0.0
        %771 = vmatpush1.msra.mxu0 0.0
        %772 = vmatprep.subr.mxu0 0.0
        %773 = vmatpush1.msra.mxu0 0.0
        %774 = vmatprep.subr.mxu0 0.0
        %775 = vmatpush1.msra.mxu0 0.0
        %776 = vmatprep.subr.mxu0 0.0
        %777 = vmatpush1.msra.mxu0 0.0
        %778 = vmatprep.subr.mxu0 0.0
        %779 = vmatpush1.msra.mxu0 0.0
        %780 = vmatprep.subr.mxu0 0.0
        %781 = vmatpush1.msra.mxu0 0.0
        %782 = vmatprep.subr.mxu0 0.0
        %783 = vmatpush1.msra.mxu0 0.0
        %784 = vmatprep.subr.mxu0 0.0
        %785 = vmatpush1.msra.mxu0 0.0
        %786 = vmatprep.subr.mxu0 0.0
        %787 = vmatpush1.msra.mxu0 0.0
        %788 = vmatprep.subr.mxu0 0.0
        %789 = vmatpush1.msra.mxu0 0.0
        %790 = vmatprep.subr.mxu0 0.0
        %791 = vmatpush1.msra.mxu0 0.0
        %792 = vmatprep.subr.mxu0 0.0
        %793 = vmatpush1.msra.mxu0 0.0
        %794 = vmatprep.subr.mxu0 0.0
        %795 = vmatpush1.msra.mxu0 0.0
        %796 = vmatprep.subr.mxu0 0.0
        %797 = vmatpush1.msra.mxu0 0.0
        %798 = vmatprep.subr.mxu0 0.0
        %799 = vmatpush1.msra.mxu0 0.0
        %800 = vmatprep.subr.mxu0 0.0
        %801 = vmatpush1.msra.mxu0 0.0
        %802 = vmatprep.subr.mxu0 0.0
        %803 = vmatpush1.msra.mxu0 0.0
        %804 = vmatprep.subr.mxu0 0.0
        %805 = vmatpush1.msra.mxu0 0.0
        %806 = vmatprep.subr.mxu0 0.0
        %807 = vmatpush1.msra.mxu0 0.0
        %808 = vmatprep.subr.mxu0 0.0
        %809 = vmatpush1.msra.mxu0 0.0
        %810 = vmatprep.subr.mxu0 0.0
        %811 = vmatpush1.msra.mxu0 0.0
        %812 = vmatprep.subr.mxu0 0.0
        %813 = vmatpush1.msra.mxu0 0.0
        %814 = vmatprep.mubr.f32.mxu0 0.0
        %815 = vmatmul.mubr.f32.gmra.mrb[0].mxu0 %v748
        %v816 = vpop.f32.mrb[0].mxu0
        %v817 = vadd.f32 0.0, %v816
        %v818 = vpop.f32.mrb[0].mxu0
        %819 = vdwg.mxu0
        %820 = vrot.lane.b32.xlu0 %v504, 120
        %v821 = vpop.permute.xlu0 %820
        %822 = vrot.lane.b32.xlu0 %v581, 120
        %v823 = vpop.permute.xlu0 %822
        %v824 = vsel %vm658, %v821, 0
        %v826 = vsel %vm658, %v823, 0
        %828 = vmatprep.subr.mxu0 0.0
        %829 = vmatpush1.xpose.msra.mxu0 %v826
        %830 = vmatprep.subr.mxu0 0.0
        %831 = vmatpush1.xpose.msra.mxu0 0.0
        %832 = vmatprep.subr.mxu0 0.0
        %833 = vmatpush1.xpose.msra.mxu0 0.0
        %834 = vmatprep.subr.mxu0 0.0
        %835 = vmatpush1.xpose.msra.mxu0 0.0
        %836 = vmatprep.subr.mxu0 0.0
        %837 = vmatpush1.xpose.msra.mxu0 0.0
        %838 = vmatprep.subr.mxu0 0.0
        %839 = vmatpush1.xpose.msra.mxu0 0.0
        %840 = vmatprep.subr.mxu0 0.0
        %841 = vmatpush1.xpose.msra.mxu0 0.0
        %842 = vmatprep.subr.mxu0 0.0
        %843 = vmatpush1.xpose.msra.mxu0 0.0
        %844 = vmatprep.subr.mxu0 0.0
        %845 = vmatpush1.xpose.msra.mxu0 0.0
        %846 = vmatprep.subr.mxu0 0.0
        %847 = vmatpush1.xpose.msra.mxu0 0.0
        %848 = vmatprep.subr.mxu0 0.0
        %849 = vmatpush1.xpose.msra.mxu0 0.0
        %850 = vmatprep.subr.mxu0 0.0
        %851 = vmatpush1.xpose.msra.mxu0 0.0
        %852 = vmatprep.subr.mxu0 0.0
        %853 = vmatpush1.xpose.msra.mxu0 0.0
        %854 = vmatprep.subr.mxu0 0.0
        %855 = vmatpush1.xpose.msra.mxu0 0.0
        %856 = vmatprep.subr.mxu0 0.0
        %857 = vmatpush1.xpose.msra.mxu0 0.0
        %858 = vmatprep.subr.mxu0 0.0
        %859 = vmatpush1.xpose.msra.mxu0 0.0
        %860 = vmatprep.subr.mxu0 0.0
        %861 = vmatpush1.xpose.msra.mxu0 0.0
        %862 = vmatprep.subr.mxu0 0.0
        %863 = vmatpush1.xpose.msra.mxu0 0.0
        %864 = vmatprep.subr.mxu0 0.0
        %865 = vmatpush1.xpose.msra.mxu0 0.0
        %866 = vmatprep.subr.mxu0 0.0
        %867 = vmatpush1.xpose.msra.mxu0 0.0
        %868 = vmatprep.subr.mxu0 0.0
        %869 = vmatpush1.xpose.msra.mxu0 0.0
        %870 = vmatprep.subr.mxu0 0.0
        %871 = vmatpush1.xpose.msra.mxu0 0.0
        %872 = vmatprep.subr.mxu0 0.0
        %873 = vmatpush1.xpose.msra.mxu0 0.0
        %874 = vmatprep.subr.mxu0 0.0
        %875 = vmatpush1.xpose.msra.mxu0 0.0
        %876 = vmatprep.subr.mxu0 0.0
        %877 = vmatpush1.xpose.msra.mxu0 0.0
        %878 = vmatprep.subr.mxu0 0.0
        %879 = vmatpush1.xpose.msra.mxu0 0.0
        %880 = vmatprep.subr.mxu0 0.0
        %881 = vmatpush1.xpose.msra.mxu0 0.0
        %882 = vmatprep.subr.mxu0 0.0
        %883 = vmatpush1.xpose.msra.mxu0 0.0
        %884 = vmatprep.subr.mxu0 0.0
        %885 = vmatpush1.xpose.msra.mxu0 0.0
        %886 = vmatprep.subr.mxu0 0.0
        %887 = vmatpush1.xpose.msra.mxu0 0.0
        %888 = vmatprep.subr.mxu0 0.0
        %889 = vmatpush1.xpose.msra.mxu0 0.0
        %890 = vmatprep.subr.mxu0 0.0
        %891 = vmatpush1.xpose.msra.mxu0 0.0
        %892 = vmatprep.mubr.f32.mxu0 0.0
        %893 = vmatmul.mubr.f32.gmra.mrb[0].mxu0 %v824
        %v894 = vpop.f32.mrb[0].mxu0
        %v895 = vadd.f32 0.0, %v894
        %v896 = vpop.f32.mrb[0].mxu0
        %897 = vdwg.mxu0
        %v898 = vsel %vm658, %v895, -inf
        %899 = vmax.xlane.f32.xlu0 %v898
        %v900 = vpop.xlane.xlu0 %899
        %v901 = vsub.f32 %v895, %v900
        %v902 = vmul.f32 %v901, 1.442695
        %v903 = vpow.pop %v902
        %v904 = vsel %vm658, %v903, 0.0
        %905 = vadd.xlane.f32.xlu0 %v904
        %v906 = vpop.xlane.xlu0 %905
        %v907 = vrcp.pop %v906
        %v908 = vmul.f32 %v903, %v907
        %s909 = scalar_lea.vmem %s426, 8 [#allocation14]
        %910 = vst.msk [vmem:[%s909] sm:$0xff] %vm658, %v908
        %912 = vrot.lane.b32.xlu0 %v655, 120
        %v913 = vpop.permute.xlu0 %912
        %v916 = vsel %vm658, %v908, 0
        %918 = vmatprep.subr.mxu0 0.0
        %919 = vmatpush1.msra.mxu0 %v913
        %920 = vmatprep.subr.mxu0 0.0
        %921 = vmatpush1.msra.mxu0 0.0
        %922 = vmatprep.subr.mxu0 0.0
        %923 = vmatpush1.msra.mxu0 0.0
        %924 = vmatprep.subr.mxu0 0.0
        %925 = vmatpush1.msra.mxu0 0.0
        %926 = vmatprep.subr.mxu0 0.0
        %927 = vmatpush1.msra.mxu0 0.0
        %928 = vmatprep.subr.mxu0 0.0
        %929 = vmatpush1.msra.mxu0 0.0
        %930 = vmatprep.subr.mxu0 0.0
        %931 = vmatpush1.msra.mxu0 0.0
        %932 = vmatprep.subr.mxu0 0.0
        %933 = vmatpush1.msra.mxu0 0.0
        %934 = vmatprep.subr.mxu0 0.0
        %935 = vmatpush1.msra.mxu0 0.0
        %936 = vmatprep.subr.mxu0 0.0
        %937 = vmatpush1.msra.mxu0 0.0
        %938 = vmatprep.subr.mxu0 0.0
        %939 = vmatpush1.msra.mxu0 0.0
        %940 = vmatprep.subr.mxu0 0.0
        %941 = vmatpush1.msra.mxu0 0.0
        %942 = vmatprep.subr.mxu0 0.0
        %943 = vmatpush1.msra.mxu0 0.0
        %944 = vmatprep.subr.mxu0 0.0
        %945 = vmatpush1.msra.mxu0 0.0
        %946 = vmatprep.subr.mxu0 0.0
        %947 = vmatpush1.msra.mxu0 0.0
        %948 = vmatprep.subr.mxu0 0.0
        %949 = vmatpush1.msra.mxu0 0.0
        %950 = vmatprep.subr.mxu0 0.0
        %951 = vmatpush1.msra.mxu0 0.0
        %952 = vmatprep.subr.mxu0 0.0
        %953 = vmatpush1.msra.mxu0 0.0
        %954 = vmatprep.subr.mxu0 0.0
        %955 = vmatpush1.msra.mxu0 0.0
        %956 = vmatprep.subr.mxu0 0.0
        %957 = vmatpush1.msra.mxu0 0.0
        %958 = vmatprep.subr.mxu0 0.0
        %959 = vmatpush1.msra.mxu0 0.0
        %960 = vmatprep.subr.mxu0 0.0
        %961 = vmatpush1.msra.mxu0 0.0
        %962 = vmatprep.subr.mxu0 0.0
        %963 = vmatpush1.msra.mxu0 0.0
        %964 = vmatprep.subr.mxu0 0.0
        %965 = vmatpush1.msra.mxu0 0.0
        %966 = vmatprep.subr.mxu0 0.0
        %967 = vmatpush1.msra.mxu0 0.0
        %968 = vmatprep.subr.mxu0 0.0
        %969 = vmatpush1.msra.mxu0 0.0
        %970 = vmatprep.subr.mxu0 0.0
        %971 = vmatpush1.msra.mxu0 0.0
        %972 = vmatprep.subr.mxu0 0.0
        %973 = vmatpush1.msra.mxu0 0.0
        %974 = vmatprep.subr.mxu0 0.0
        %975 = vmatpush1.msra.mxu0 0.0
        %976 = vmatprep.subr.mxu0 0.0
        %977 = vmatpush1.msra.mxu0 0.0
        %978 = vmatprep.subr.mxu0 0.0
        %979 = vmatpush1.msra.mxu0 0.0
        %980 = vmatprep.subr.mxu0 0.0
        %981 = vmatpush1.msra.mxu0 0.0
        %982 = vmatprep.mubr.f32.mxu0 0.0
        %983 = vmatmul.mubr.f32.gmra.mrb[0].mxu0 %v916
        %v984 = vpop.f32.mrb[0].mxu0
        %v985 = vadd.f32 0.0, %v984
        %v986 = vpop.f32.mrb[0].mxu0
        %987 = vdwg.mxu0
        %988 = vrot.lane.b32.xlu0 %v504, 112
        %v989 = vpop.permute.xlu0 %988
        %990 = vrot.lane.b32.xlu0 %v581, 112
        %v991 = vpop.permute.xlu0 %990
        %v992 = vsel %vm658, %v989, 0
        %v994 = vsel %vm658, %v991, 0
        %996 = vmatprep.subr.mxu0 0.0
        %997 = vmatpush1.xpose.msra.mxu0 %v994
        %998 = vmatprep.subr.mxu0 0.0
        %999 = vmatpush1.xpose.msra.mxu0 0.0
        %1000 = vmatprep.subr.mxu0 0.0
        %1001 = vmatpush1.xpose.msra.mxu0 0.0
        %1002 = vmatprep.subr.mxu0 0.0
        %1003 = vmatpush1.xpose.msra.mxu0 0.0
        %1004 = vmatprep.subr.mxu0 0.0
        %1005 = vmatpush1.xpose.msra.mxu0 0.0
        %1006 = vmatprep.subr.mxu0 0.0
        %1007 = vmatpush1.xpose.msra.mxu0 0.0
        %1008 = vmatprep.subr.mxu0 0.0
        %1009 = vmatpush1.xpose.msra.mxu0 0.0
        %1010 = vmatprep.subr.mxu0 0.0
        %1011 = vmatpush1.xpose.msra.mxu0 0.0
        %1012 = vmatprep.subr.mxu0 0.0
        %1013 = vmatpush1.xpose.msra.mxu0 0.0
        %1014 = vmatprep.subr.mxu0 0.0
        %1015 = vmatpush1.xpose.msra.mxu0 0.0
        %1016 = vmatprep.subr.mxu0 0.0
        %1017 = vmatpush1.xpose.msra.mxu0 0.0
        %1018 = vmatprep.subr.mxu0 0.0
        %1019 = vmatpush1.xpose.msra.mxu0 0.0
        %1020 = vmatprep.subr.mxu0 0.0
        %1021 = vmatpush1.xpose.msra.mxu0 0.0
        %1022 = vmatprep.subr.mxu0 0.0
        %1023 = vmatpush1.xpose.msra.mxu0 0.0
        %1024 = vmatprep.subr.mxu0 0.0
        %1025 = vmatpush1.xpose.msra.mxu0 0.0
        %1026 = vmatprep.subr.mxu0 0.0
        %1027 = vmatpush1.xpose.msra.mxu0 0.0
        %1028 = vmatprep.subr.mxu0 0.0
        %1029 = vmatpush1.xpose.msra.mxu0 0.0
        %1030 = vmatprep.subr.mxu0 0.0
        %1031 = vmatpush1.xpose.msra.mxu0 0.0
        %1032 = vmatprep.subr.mxu0 0.0
        %1033 = vmatpush1.xpose.msra.mxu0 0.0
        %1034 = vmatprep.subr.mxu0 0.0
        %1035 = vmatpush1.xpose.msra.mxu0 0.0
        %1036 = vmatprep.subr.mxu0 0.0
        %1037 = vmatpush1.xpose.msra.mxu0 0.0
        %1038 = vmatprep.subr.mxu0 0.0
        %1039 = vmatpush1.xpose.msra.mxu0 0.0
        %1040 = vmatprep.subr.mxu0 0.0
        %1041 = vmatpush1.xpose.msra.mxu0 0.0
        %1042 = vmatprep.subr.mxu0 0.0
        %1043 = vmatpush1.xpose.msra.mxu0 0.0
        %1044 = vmatprep.subr.mxu0 0.0
        %1045 = vmatpush1.xpose.msra.mxu0 0.0
        %1046 = vmatprep.subr.mxu0 0.0
        %1047 = vmatpush1.xpose.msra.mxu0 0.0
        %1048 = vmatprep.subr.mxu0 0.0
        %1049 = vmatpush1.xpose.msra.mxu0 0.0
        %1050 = vmatprep.subr.mxu0 0.0
        %1051 = vmatpush1.xpose.msra.mxu0 0.0
        %1052 = vmatprep.subr.mxu0 0.0
        %1053 = vmatpush1.xpose.msra.mxu0 0.0
        %1054 = vmatprep.subr.mxu0 0.0
        %1055 = vmatpush1.xpose.msra.mxu0 0.0
        %1056 = vmatprep.subr.mxu0 0.0
        %1057 = vmatpush1.xpose.msra.mxu0 0.0
        %1058 = vmatprep.subr.mxu0 0.0
        %1059 = vmatpush1.xpose.msra.mxu0 0.0
        %1060 = vmatprep.mubr.f32.mxu0 0.0
        %1061 = vmatmul.mubr.f32.gmra.mrb[0].mxu0 %v992
        %v1062 = vpop.f32.mrb[0].mxu0
        %v1063 = vadd.f32 0.0, %v1062
        %v1064 = vpop.f32.mrb[0].mxu0
        %1065 = vdwg.mxu0
        %v1066 = vsel %vm658, %v1063, -inf
        %1067 = vmax.xlane.f32.xlu0 %v1066
        %v1068 = vpop.xlane.xlu0 %1067
        %v1069 = vsub.f32 %v1063, %v1068
        %v1070 = vmul.f32 %v1069, 1.442695
        %v1071 = vpow.pop %v1070
        %v1072 = vsel %vm658, %v1071, 0.0
        %1073 = vadd.xlane.f32.xlu0 %v1072
        %v1074 = vpop.xlane.xlu0 %1073
        %v1075 = vrcp.pop %v1074
        %v1076 = vmul.f32 %v1071, %v1075
        %s1077 = scalar_lea.vmem %s426, 16 [#allocation14]
        %1078 = vst.msk [vmem:[%s1077] sm:$0xff] %vm658, %v1076
        %1079 = vrot.lane.b32.xlu0 %v655, 112
        %v1080 = vpop.permute.xlu0 %1079
        %v1083 = vsel %vm658, %v1076, 0
        %1085 = vmatprep.subr.mxu0 0.0
        %1086 = vmatpush1.msra.mxu0 %v1080
        %1087 = vmatprep.subr.mxu0 0.0
        %1088 = vmatpush1.msra.mxu0 0.0
        %1089 = vmatprep.subr.mxu0 0.0
        %1090 = vmatpush1.msra.mxu0 0.0
        %1091 = vmatprep.subr.mxu0 0.0
        %1092 = vmatpush1.msra.mxu0 0.0
        %1093 = vmatprep.subr.mxu0 0.0
        %1094 = vmatpush1.msra.mxu0 0.0
        %1095 = vmatprep.subr.mxu0 0.0
        %1096 = vmatpush1.msra.mxu0 0.0
        %1097 = vmatprep.subr.mxu0 0.0
        %1098 = vmatpush1.msra.mxu0 0.0
        %1099 = vmatprep.subr.mxu0 0.0
        %1100 = vmatpush1.msra.mxu0 0.0
        %1101 = vmatprep.subr.mxu0 0.0
        %1102 = vmatpush1.msra.mxu0 0.0
        %1103 = vmatprep.subr.mxu0 0.0
        %1104 = vmatpush1.msra.mxu0 0.0
        %1105 = vmatprep.subr.mxu0 0.0
        %1106 = vmatpush1.msra.mxu0 0.0
        %1107 = vmatprep.subr.mxu0 0.0
        %1108 = vmatpush1.msra.mxu0 0.0
        %1109 = vmatprep.subr.mxu0 0.0
        %1110 = vmatpush1.msra.mxu0 0.0
        %1111 = vmatprep.subr.mxu0 0.0
        %1112 = vmatpush1.msra.mxu0 0.0
        %1113 = vmatprep.subr.mxu0 0.0
        %1114 = vmatpush1.msra.mxu0 0.0
        %1115 = vmatprep.subr.mxu0 0.0
        %1116 = vmatpush1.msra.mxu0 0.0
        %1117 = vmatprep.subr.mxu0 0.0
        %1118 = vmatpush1.msra.mxu0 0.0
        %1119 = vmatprep.subr.mxu0 0.0
        %1120 = vmatpush1.msra.mxu0 0.0
        %1121 = vmatprep.subr.mxu0 0.0
        %1122 = vmatpush1.msra.mxu0 0.0
        %1123 = vmatprep.subr.mxu0 0.0
        %1124 = vmatpush1.msra.mxu0 0.0
        %1125 = vmatprep.subr.mxu0 0.0
        %1126 = vmatpush1.msra.mxu0 0.0
        %1127 = vmatprep.subr.mxu0 0.0
        %1128 = vmatpush1.msra.mxu0 0.0
        %1129 = vmatprep.subr.mxu0 0.0
        %1130 = vmatpush1.msra.mxu0 0.0
        %1131 = vmatprep.subr.mxu0 0.0
        %1132 = vmatpush1.msra.mxu0 0.0
        %1133 = vmatprep.subr.mxu0 0.0
        %1134 = vmatpush1.msra.mxu0 0.0
        %1135 = vmatprep.subr.mxu0 0.0
        %1136 = vmatpush1.msra.mxu0 0.0
        %1137 = vmatprep.subr.mxu0 0.0
        %1138 = vmatpush1.msra.mxu0 0.0
        %1139 = vmatprep.subr.mxu0 0.0
        %1140 = vmatpush1.msra.mxu0 0.0
        %1141 = vmatprep.subr.mxu0 0.0
        %1142 = vmatpush1.msra.mxu0 0.0
        %1143 = vmatprep.subr.mxu0 0.0
        %1144 = vmatpush1.msra.mxu0 0.0
        %1145 = vmatprep.subr.mxu0 0.0
        %1146 = vmatpush1.msra.mxu0 0.0
        %1147 = vmatprep.subr.mxu0 0.0
        %1148 = vmatpush1.msra.mxu0 0.0
        %1149 = vmatprep.mubr.f32.mxu0 0.0
        %1150 = vmatmul.mubr.f32.gmra.mrb[0].mxu0 %v1083
        %v1151 = vpop.f32.mrb[0].mxu0
        %v1152 = vadd.f32 0.0, %v1151
        %v1153 = vpop.f32.mrb[0].mxu0
        %1154 = vdwg.mxu0
        %1155 = vrot.lane.b32.xlu0 %v504, 104
        %v1156 = vpop.permute.xlu0 %1155
        %1157 = vrot.lane.b32.xlu0 %v581, 104
        %v1158 = vpop.permute.xlu0 %1157
        %v1159 = vsel %vm658, %v1156, 0
        %v1161 = vsel %vm658, %v1158, 0
        %1163 = vmatprep.subr.mxu0 0.0
        %1164 = vmatpush1.xpose.msra.mxu0 %v1161
        %1165 = vmatprep.subr.mxu0 0.0
        %1166 = vmatpush1.xpose.msra.mxu0 0.0
        %1167 = vmatprep.subr.mxu0 0.0
        %1168 = vmatpush1.xpose.msra.mxu0 0.0
        %1169 = vmatprep.subr.mxu0 0.0
        %1170 = vmatpush1.xpose.msra.mxu0 0.0
        %1171 = vmatprep.subr.mxu0 0.0
        %1172 = vmatpush1.xpose.msra.mxu0 0.0
        %1173 = vmatprep.subr.mxu0 0.0
        %1174 = vmatpush1.xpose.msra.mxu0 0.0
        %1175 = vmatprep.subr.mxu0 0.0
        %1176 = vmatpush1.xpose.msra.mxu0 0.0
        %1177 = vmatprep.subr.mxu0 0.0
        %1178 = vmatpush1.xpose.msra.mxu0 0.0
        %1179 = vmatprep.subr.mxu0 0.0
        %1180 = vmatpush1.xpose.msra.mxu0 0.0
        %1181 = vmatprep.subr.mxu0 0.0
        %1182 = vmatpush1.xpose.msra.mxu0 0.0
        %1183 = vmatprep.subr.mxu0 0.0
        %1184 = vmatpush1.xpose.msra.mxu0 0.0
        %1185 = vmatprep.subr.mxu0 0.0
        %1186 = vmatpush1.xpose.msra.mxu0 0.0
        %1187 = vmatprep.subr.mxu0 0.0
        %1188 = vmatpush1.xpose.msra.mxu0 0.0
        %1189 = vmatprep.subr.mxu0 0.0
        %1190 = vmatpush1.xpose.msra.mxu0 0.0
        %1191 = vmatprep.subr.mxu0 0.0
        %1192 = vmatpush1.xpose.msra.mxu0 0.0
        %1193 = vmatprep.subr.mxu0 0.0
        %1194 = vmatpush1.xpose.msra.mxu0 0.0
        %1195 = vmatprep.subr.mxu0 0.0
        %1196 = vmatpush1.xpose.msra.mxu0 0.0
        %1197 = vmatprep.subr.mxu0 0.0
        %1198 = vmatpush1.xpose.msra.mxu0 0.0
        %1199 = vmatprep.subr.mxu0 0.0
        %1200 = vmatpush1.xpose.msra.mxu0 0.0
        %1201 = vmatprep.subr.mxu0 0.0
        %1202 = vmatpush1.xpose.msra.mxu0 0.0
        %1203 = vmatprep.subr.mxu0 0.0
        %1204 = vmatpush1.xpose.msra.mxu0 0.0
        %1205 = vmatprep.subr.mxu0 0.0
        %1206 = vmatpush1.xpose.msra.mxu0 0.0
        %1207 = vmatprep.subr.mxu0 0.0
        %1208 = vmatpush1.xpose.msra.mxu0 0.0
        %1209 = vmatprep.subr.mxu0 0.0
        %1210 = vmatpush1.xpose.msra.mxu0 0.0
        %1211 = vmatprep.subr.mxu0 0.0
        %1212 = vmatpush1.xpose.msra.mxu0 0.0
        %1213 = vmatprep.subr.mxu0 0.0
        %1214 = vmatpush1.xpose.msra.mxu0 0.0
        %1215 = vmatprep.subr.mxu0 0.0
        %1216 = vmatpush1.xpose.msra.mxu0 0.0
        %1217 = vmatprep.subr.mxu0 0.0
        %1218 = vmatpush1.xpose.msra.mxu0 0.0
        %1219 = vmatprep.subr.mxu0 0.0
        %1220 = vmatpush1.xpose.msra.mxu0 0.0
        %1221 = vmatprep.subr.mxu0 0.0
        %1222 = vmatpush1.xpose.msra.mxu0 0.0
        %1223 = vmatprep.subr.mxu0 0.0
        %1224 = vmatpush1.xpose.msra.mxu0 0.0
        %1225 = vmatprep.subr.mxu0 0.0
        %1226 = vmatpush1.xpose.msra.mxu0 0.0
        %1227 = vmatprep.mubr.f32.mxu0 0.0
        %1228 = vmatmul.mubr.f32.gmra.mrb[0].mxu0 %v1159
        %v1229 = vpop.f32.mrb[0].mxu0
        %v1230 = vadd.f32 0.0, %v1229
        %v1231 = vpop.f32.mrb[0].mxu0
        %1232 = vdwg.mxu0
        %v1233 = vsel %vm658, %v1230, -inf
        %1234 = vmax.xlane.f32.xlu0 %v1233
        %v1235 = vpop.xlane.xlu0 %1234
        %v1236 = vsub.f32 %v1230, %v1235
        %v1237 = vmul.f32 %v1236, 1.442695
        %v1238 = vpow.pop %v1237
        %v1239 = vsel %vm658, %v1238, 0.0
        %1240 = vadd.xlane.f32.xlu0 %v1239
        %v1241 = vpop.xlane.xlu0 %1240
        %v1242 = vrcp.pop %v1241
        %v1243 = vmul.f32 %v1238, %v1242
        %s1244 = scalar_lea.vmem %s426, 24 [#allocation14]
        %1245 = vst.msk [vmem:[%s1244] sm:$0xff] %vm658, %v1243
        %1246 = vrot.lane.b32.xlu0 %v655, 104
        %v1247 = vpop.permute.xlu0 %1246
        %v1250 = vsel %vm658, %v1243, 0
        %1252 = vmatprep.subr.mxu0 0.0
        %1253 = vmatpush1.msra.mxu0 %v1247
        %1254 = vmatprep.subr.mxu0 0.0
        %1255 = vmatpush1.msra.mxu0 0.0
        %1256 = vmatprep.subr.mxu0 0.0
        %1257 = vmatpush1.msra.mxu0 0.0
        %1258 = vmatprep.subr.mxu0 0.0
        %1259 = vmatpush1.msra.mxu0 0.0
        %1260 = vmatprep.subr.mxu0 0.0
        %1261 = vmatpush1.msra.mxu0 0.0
        %1262 = vmatprep.subr.mxu0 0.0
        %1263 = vmatpush1.msra.mxu0 0.0
        %1264 = vmatprep.subr.mxu0 0.0
        %1265 = vmatpush1.msra.mxu0 0.0
        %1266 = vmatprep.subr.mxu0 0.0
        %1267 = vmatpush1.msra.mxu0 0.0
        %1268 = vmatprep.subr.mxu0 0.0
        %1269 = vmatpush1.msra.mxu0 0.0
        %1270 = vmatprep.subr.mxu0 0.0
        %1271 = vmatpush1.msra.mxu0 0.0
        %1272 = vmatprep.subr.mxu0 0.0
        %1273 = vmatpush1.msra.mxu0 0.0
        %1274 = vmatprep.subr.mxu0 0.0
        %1275 = vmatpush1.msra.mxu0 0.0
        %1276 = vmatprep.subr.mxu0 0.0
        %1277 = vmatpush1.msra.mxu0 0.0
        %1278 = vmatprep.subr.mxu0 0.0
        %1279 = vmatpush1.msra.mxu0 0.0
        %1280 = vmatprep.subr.mxu0 0.0
        %1281 = vmatpush1.msra.mxu0 0.0
        %1282 = vmatprep.subr.mxu0 0.0
        %1283 = vmatpush1.msra.mxu0 0.0
        %1284 = vmatprep.subr.mxu0 0.0
        %1285 = vmatpush1.msra.mxu0 0.0
        %1286 = vmatprep.subr.mxu0 0.0
        %1287 = vmatpush1.msra.mxu0 0.0
        %1288 = vmatprep.subr.mxu0 0.0
        %1289 = vmatpush1.msra.mxu0 0.0
        %1290 = vmatprep.subr.mxu0 0.0
        %1291 = vmatpush1.msra.mxu0 0.0
        %1292 = vmatprep.subr.mxu0 0.0
        %1293 = vmatpush1.msra.mxu0 0.0
        %1294 = vmatprep.subr.mxu0 0.0
        %1295 = vmatpush1.msra.mxu0 0.0
        %1296 = vmatprep.subr.mxu0 0.0
        %1297 = vmatpush1.msra.mxu0 0.0
        %1298 = vmatprep.subr.mxu0 0.0
        %1299 = vmatpush1.msra.mxu0 0.0
        %1300 = vmatprep.subr.mxu0 0.0
        %1301 = vmatpush1.msra.mxu0 0.0
        %1302 = vmatprep.subr.mxu0 0.0
        %1303 = vmatpush1.msra.mxu0 0.0
        %1304 = vmatprep.subr.mxu0 0.0
        %1305 = vmatpush1.msra.mxu0 0.0
        %1306 = vmatprep.subr.mxu0 0.0
        %1307 = vmatpush1.msra.mxu0 0.0
        %1308 = vmatprep.subr.mxu0 0.0
        %1309 = vmatpush1.msra.mxu0 0.0
        %1310 = vmatprep.subr.mxu0 0.0
        %1311 = vmatpush1.msra.mxu0 0.0
        %1312 = vmatprep.subr.mxu0 0.0
        %1313 = vmatpush1.msra.mxu0 0.0
        %1314 = vmatprep.subr.mxu0 0.0
        %1315 = vmatpush1.msra.mxu0 0.0
        %1316 = vmatprep.mubr.f32.mxu0 0.0
        %1317 = vmatmul.mubr.f32.gmra.mrb[0].mxu0 %v1250
        %v1318 = vpop.f32.mrb[0].mxu0
        %v1319 = vadd.f32 0.0, %v1318
        %v1320 = vpop.f32.mrb[0].mxu0
        %1321 = vdwg.mxu0
        %1323 = vrot.lane.b32.xlu0 %v985, 8
        %v1324 = vpop.permute.xlu0 %1323
        %1327 = vrot.lane.b32.xlu0 %v1152, 16
        %v1328 = vpop.permute.xlu0 %1327
        %1331 = vrot.lane.b32.xlu0 %v1319, 24
        %v1332 = vpop.permute.xlu0 %1331
        %v1334 = vsel %vm658, %v817, %v1324
        %vm1335 = vcmask 130048
        %v1336 = vsel %vm1335, %v1334, %v1328
        %vm1337 = vcmask 195584
        %v1338 = vsel %vm1337, %v1336, %v1332
        %v1339 = vld [vmem:[#allocation11] sm:$0xff]
        %v1340 = vld [vmem:[#allocation11 + $0x8] sm:$0xff]
        %v1341 = vld [vmem:[#allocation11 + $0x10] sm:$0xff]
        %v1342 = vld [vmem:[#allocation11 + $0x18] sm:$0xff]
        %v1343 = vld [vmem:[%s6] sm:$0x1]
        %v1345 = vlaneseq
        %v1346 = vshrl.u32 %v1345, 7
        %v1347 = vsub.s32 0, %v1346
        %v1348 = vrot.slane %v1343, %v1347
        %v1351 = vsel %vm433, %v1338, 0
        %1353 = vmatprep.subr.mxu0 0.0
        %1354 = vmatpush1.msra.mxu0 %v1339
        %1355 = vmatprep.subr.mxu0 0.0
        %1356 = vmatpush1.msra.mxu0 %v1340
        %1357 = vmatprep.subr.mxu0 0.0
        %1358 = vmatpush1.msra.mxu0 %v1341
        %1359 = vmatprep.subr.mxu0 0.0
        %1360 = vmatpush1.msra.mxu0 %v1342
        %1361 = vmatprep.subr.mxu0 0.0
        %1362 = vmatpush1.msra.mxu0 0.0
        %1363 = vmatprep.subr.mxu0 0.0
        %1364 = vmatpush1.msra.mxu0 0.0
        %1365 = vmatprep.subr.mxu0 0.0
        %1366 = vmatpush1.msra.mxu0 0.0
        %1367 = vmatprep.subr.mxu0 0.0
        %1368 = vmatpush1.msra.mxu0 0.0
        %1369 = vmatprep.subr.mxu0 0.0
        %1370 = vmatpush1.msra.mxu0 0.0
        %1371 = vmatprep.subr.mxu0 0.0
        %1372 = vmatpush1.msra.mxu0 0.0
        %1373 = vmatprep.subr.mxu0 0.0
        %1374 = vmatpush1.msra.mxu0 0.0
        %1375 = vmatprep.subr.mxu0 0.0
        %1376 = vmatpush1.msra.mxu0 0.0
        %1377 = vmatprep.subr.mxu0 0.0
        %1378 = vmatpush1.msra.mxu0 0.0
        %1379 = vmatprep.subr.mxu0 0.0
        %1380 = vmatpush1.msra.mxu0 0.0
        %1381 = vmatprep.subr.mxu0 0.0
        %1382 = vmatpush1.msra.mxu0 0.0
        %1383 = vmatprep.subr.mxu0 0.0
        %1384 = vmatpush1.msra.mxu0 0.0
        %1385 = vmatprep.subr.mxu0 0.0
        %1386 = vmatpush1.msra.mxu0 0.0
        %1387 = vmatprep.subr.mxu0 0.0
        %1388 = vmatpush1.msra.mxu0 0.0
        %1389 = vmatprep.subr.mxu0 0.0
        %1390 = vmatpush1.msra.mxu0 0.0
        %1391 = vmatprep.subr.mxu0 0.0
        %1392 = vmatpush1.msra.mxu0 0.0
        %1393 = vmatprep.subr.mxu0 0.0
        %1394 = vmatpush1.msra.mxu0 0.0
        %1395 = vmatprep.subr.mxu0 0.0
        %1396 = vmatpush1.msra.mxu0 0.0
        %1397 = vmatprep.subr.mxu0 0.0
        %1398 = vmatpush1.msra.mxu0 0.0
        %1399 = vmatprep.subr.mxu0 0.0
        %1400 = vmatpush1.msra.mxu0 0.0
        %1401 = vmatprep.subr.mxu0 0.0
        %1402 = vmatpush1.msra.mxu0 0.0
        %1403 = vmatprep.subr.mxu0 0.0
        %1404 = vmatpush1.msra.mxu0 0.0
        %1405 = vmatprep.subr.mxu0 0.0
        %1406 = vmatpush1.msra.mxu0 0.0
        %1407 = vmatprep.subr.mxu0 0.0
        %1408 = vmatpush1.msra.mxu0 0.0
        %1409 = vmatprep.subr.mxu0 0.0
        %1410 = vmatpush1.msra.mxu0 0.0
        %1411 = vmatprep.subr.mxu0 0.0
        %1412 = vmatpush1.msra.mxu0 0.0
        %1413 = vmatprep.subr.mxu0 0.0
        %1414 = vmatpush1.msra.mxu0 0.0
        %1415 = vmatprep.subr.mxu0 0.0
        %1416 = vmatpush1.msra.mxu0 0.0
        %1417 = vmatprep.mubr.f32.mxu0 0.0
        %1418 = vmatmul.mubr.f32.gmra.mrb[0].mxu0 %v1351
        %v1419 = vpop.f32.mrb[0].mxu0
        %v1420 = vadd.f32 %v1348, %v1419
        %v1421 = vpop.f32.mrb[0].mxu0
        %1422 = vdwg.mxu0
        %1423 = vst.msk [vmem:[%s419] sm:$0xff] %vm433, %v1420
        %s1424 = sand.u32 %s199, 1
        %s1425 = scalar_lea.sflag [#allocation4], %s1424
        %s1426 = sand.u32 %s199, 1
        %s1427 = smul.addr %s1426, 8
        %s1428 = scalar_lea.vmem [#allocation13], %s1427
        %s1429 = sand.u32 %s225, 1
        %s1430 = scalar_lea.sflag [#allocation15], %s1429
        %s1431 = sand.u32 %s225, 1
        %s1432 = smul.addr %s1431, 32
        %s1433 = scalar_lea.vmem [#allocation14], %s1432
        // Predicated region
        $region73: #{tpu_custom_call.1} parent=47 // pred_check
          %p1434 = pneg %p209
        $region74: #{tpu_custom_call.1} parent=47 // pred_check_branch
          %1436 = sbr.rel (%p1434) target = $region76
        $region75: #{tpu_custom_call.1} parent=47 // pred_region
          %s1438 = ssub.s32 128, 128
          %1439 = vsyncadd %s1425, %s1438
          %s1440 = smul.addr %s34, 128
          %s1441 = scalar_lea.hbm %s7, %s1440
          %s1443 = sshll.u32 %s1428, 4
          %s1444 = int_to_ptr.vmem [resolvable:$true] %s1443
          %1446 = dma.vmem_to_hbm [thread:$0]  %s1444, 128, %s1441, %s1425
        $region76: #{tpu_custom_call.1} parent=47 // pred_fallthru
          _
        // Predicated region
        $region77: #{tpu_custom_call.1} parent=47 // pred_check
          %p1447 = pneg %p235
        $region78: #{tpu_custom_call.1} parent=47 // pred_check_branch
          %1449 = sbr.rel (%p1447) target = $region80
        $region79: #{tpu_custom_call.1} parent=47 // pred_region
          %s1451 = ssub.s32 512, 512
          %1452 = vsyncadd %s1430, %s1451
          %s1453 = smul.addr %s34, 4
          %s1454 = smul.addr %s1453, 128
          %s1455 = scalar_lea.hbm %s8, %s1454
          %s1456 = sshll.u32 %s1433, 4
          %s1457 = int_to_ptr.vmem [resolvable:$true] %s1456
          %1462 = dma.vmem_to_hbm [thread:$0]  %s1457, 512, %s1455, %s1430, 128, 128, 8
        $region80: #{tpu_custom_call.1} parent=47 // pred_fallthru
          _
      $region48: #{tpu_custom_call.1} parent=5 // pred_fallthru
        _
      %p1463 = scmp.le.s32.totalorder 2, %s29
      // Predicated region
      $region81: #{tpu_custom_call.1} parent=5 // pred_check
        %p1464 = pneg %p1463
      $region82: #{tpu_custom_call.1} parent=5 // pred_check_branch
        %1466 = sbr.rel (%p1464) target = $region84
      $region83: #{tpu_custom_call.1} parent=5 // pred_region
        %s1467 = ssub.s32 %s29, 2
        // Predicated region
        $region85: #{tpu_custom_call.1} parent=83 // pred_check
          %p1468 = pneg %p215
        $region86: #{tpu_custom_call.1} parent=83 // pred_check_branch
          %1470 = sbr.rel (%p1468) target = $region88
        $region87: #{tpu_custom_call.1} parent=83 // pred_region
          %s1471 = sand.u32 %s200, 1
          %s1472 = scalar_lea.sflag [#allocation4], %s1471
          %s1473 = sand.u32 %s200, 1
          %s1474 = smul.addr %s1473, 8
          %s1475 = scalar_lea.vmem [#allocation13], %s1474
          %1476 = dma.done %s1472, 128
        $region88: #{tpu_custom_call.1} parent=83 // pred_fallthru
          _
        // Predicated region
        $region89: #{tpu_custom_call.1} parent=83 // pred_check
          %p1477 = pneg %p241
        $region90: #{tpu_custom_call.1} parent=83 // pred_check_branch
          %1479 = sbr.rel (%p1477) target = $region92
        $region91: #{tpu_custom_call.1} parent=83 // pred_region
          %s1480 = sand.u32 %s226, 1
          %s1481 = scalar_lea.sflag [#allocation15], %s1480
          %s1482 = sand.u32 %s226, 1
          %s1483 = smul.addr %s1482, 32
          %s1484 = scalar_lea.vmem [#allocation14], %s1483
          %1485 = dma.done %s1481, 512
        $region92: #{tpu_custom_call.1} parent=83 // pred_fallthru
          _
      $region84: #{tpu_custom_call.1} parent=5 // pred_fallthru
        _
    $region6: #{tpu_custom_call.1} parent=1 // loop_footer
      %s33 = sadd.s32 1, %s29
    $region7: #{tpu_custom_call.1} parent=1 // loop_footer_branch
      %28 = sbr.rel target = $region3
    $region8: #{tpu_custom_call.1} parent=1 // loop_exit
      _
    %1486 = vsyncpa [#allocation3], 1
    %s1487 = scalar_lea.sflag [#allocation3], 1
    %1488 = vsyncpa %s1487, 1
    %1489 = vsyncpa [#allocation6], 1
    %s1490 = scalar_lea.sflag [#allocation6], 1
    %1491 = vsyncpa %s1490, 1
    %1492 = vsyncpa [#allocation9], 1
    %1493 = vsyncpa [#allocation12], 1
    %1494 = vsyncpa [#allocation4], 1
    %s1495 = scalar_lea.sflag [#allocation4], 1
    %1496 = vsyncpa %s1495, 1
    %1497 = vsyncpa [#allocation15], 1
    %s1498 = scalar_lea.sflag [#allocation15], 1
    %1499 = vsyncpa %s1498, 1

</llo_original>
